<compile_context>
chip_gen: v5e
topology: v5e:2x2
jax: 0.10.0
libtpu: 0.0.40
codegen_flags: <defaults>
</compile_context>

<pallas_src>
import functools

import jax
import jax.numpy as jnp
from jax import lax
from jax.experimental import pallas as pl
from jax.experimental.pallas import tpu as pltpu

CFG = dict(
    vocab_size=256,
    context_length=16,
    emb_dim=32,
    n_heads=4,
    n_layers=2,
    drop_rate=0.0,   # dropout is identity in this forward pass
    qkv_bias=False,
)


# ----------------------------- in-kernel helpers -----------------------------
def _layernorm(x, scale, shift, eps=1e-5):
    mean = jnp.mean(x, axis=-1, keepdims=True)
    var = jnp.mean((x - mean) ** 2, axis=-1, keepdims=True)   # unbiased=False
    return scale * ((x - mean) * lax.rsqrt(var + eps)) + shift


def _gelu(x):
    # matches the module's custom tanh-approximation GELU
    return 0.5 * x * (1.0 + jnp.tanh(jnp.sqrt(2.0 / jnp.pi) * (x + 0.044715 * x ** 3)))


# ----------------------- fused full-forward kernel ---------------------------
def gpt_kernel(x_ref,
               ln1s_ref, ln1b_ref, wqkv_ref, wo_ref, bo_ref,
               ln2s_ref, ln2b_ref, w1_ref, b1_ref, w2_ref, b2_ref,
               lnfs_ref, lnfb_ref, wout_ref,
               o_ref, *, num_layers, num_heads):
    x = x_ref[0]                          # (T, D) f32 — one batch elem per grid step
    T, D = x.shape
    hd = D // num_heads
    q_scale = 1.0 / (hd ** 0.5)

    # Causal mask: built once per kernel invocation, reused by all layers/heads.
    row = lax.broadcasted_iota(jnp.int32, (T, T), 0)
    col = lax.broadcasted_iota(jnp.int32, (T, T), 1)
    causal = col > row                    # True above the diagonal

    for l in range(num_layers):           # static unroll (n_layers is small)
        # ---- attention sub-block: x = x + Attn(LN1(x)) ----
        shortcut = x
        xn = _layernorm(x, ln1s_ref[l], ln1b_ref[l])
        qkv = jnp.dot(xn, wqkv_ref[l], preferred_element_type=jnp.float32)  # (T, 3D)
        q = qkv[:, :D] * q_scale          # scale q (cheaper than scaling (T,T) scores)
        k = qkv[:, D:2 * D]
        v = qkv[:, 2 * D:]

        ctx_heads = []
        for h in range(num_heads):        # static per-head loop
            qh = q[:, h * hd:(h + 1) * hd]
            kh = k[:, h * hd:(h + 1) * hd]
            vh = v[:, h * hd:(h + 1) * hd]
            s = jnp.einsum('qd,kd->qk', qh, kh,
                           preferred_element_type=jnp.float32)   # q @ k^T
            # every row has its diagonal unmasked, so -inf is safe (matches torch)
            s = jnp.where(causal, -jnp.inf, s)
            m = jnp.max(s, axis=-1, keepdims=True)
            p = jnp.exp(s - m)
            inv = pl.reciprocal(jnp.sum(p, axis=-1, keepdims=True), approx=True)
            w = p * inv
            ctx_heads.append(jnp.dot(w, vh, preferred_element_type=jnp.float32))
        ctx = jnp.concatenate(ctx_heads, axis=-1)                 # (T, D)
        attn = jnp.dot(ctx, wo_ref[l], preferred_element_type=jnp.float32) + bo_ref[l]
        x = attn + shortcut

        # ---- feed-forward sub-block: x = x + FF(LN2(x)) ----
        shortcut = x
        xn = _layernorm(x, ln2s_ref[l], ln2b_ref[l])
        h1 = jnp.dot(xn, w1_ref[l], preferred_element_type=jnp.float32) + b1_ref[l]
        h1 = _gelu(h1)
        ff = jnp.dot(h1, w2_ref[l], preferred_element_type=jnp.float32) + b2_ref[l]
        x = ff + shortcut

    # ---- final LayerNorm + lm head (fused; lane-dense (T, V) store) ----
    xn = _layernorm(x, lnfs_ref[...], lnfb_ref[...])
    o_ref[0] = jnp.dot(xn, wout_ref[...], preferred_element_type=jnp.float32)


def _const_index_map(ndim):
    return lambda b: (0,) * ndim


def gpt_pallas_call(x, packed, cfg):
    B, T, D = x.shape
    V = cfg['vocab_size']

    weights = [packed['ln1_s'], packed['ln1_b'], packed['w_qkv'],
               packed['wo'], packed['bo'],
               packed['ln2_s'], packed['ln2_b'],
               packed['w1'], packed['b1'], packed['w2'], packed['b2'],
               packed['lnf_s'], packed['lnf_b'], packed['w_out']]

    in_specs = [pl.BlockSpec((1, T, D), lambda b: (b, 0, 0))]               # activations
    in_specs += [pl.BlockSpec(w.shape, _const_index_map(w.ndim)) for w in weights]
    out_spec = pl.BlockSpec((1, T, V), lambda b: (b, 0, 0))

    kernel = functools.partial(gpt_kernel,
                               num_layers=cfg['n_layers'],
                               num_heads=cfg['n_heads'])
    return pl.pallas_call(
        kernel,
        out_shape=jax.ShapeDtypeStruct((B, T, V), jnp.float32),
        grid=(B,),
        in_specs=in_specs,
        out_specs=out_spec,
        compiler_params=pltpu.CompilerParams(
            dimension_semantics=("parallel",)),   # v7x: one batch elem per TC
    )(x, *weights)


# ------------------------------ parameter init ------------------------------
def init_params(key, cfg):
    D = cfg['emb_dim']
    V = cfg['vocab_size']
    C = cfg['context_length']
    L = cfg['n_layers']
    keys = jax.random.split(key, 3 + L * 6)
    ki = iter(keys)

    def w(k, shape):
        return (0.02 * jax.random.normal(k, shape)).astype(jnp.float32)

    params = {
        'tok_emb': w(next(ki), (V, D)),
        'pos_emb': w(next(ki), (C, D)),
        'blocks': [],
        'lnf_s': jnp.ones((1, D), jnp.float32),
        'lnf_b': jnp.zeros((1, D), jnp.float32),
        'w_out': w(next(ki), (D, V)),
    }
    for _ in range(L):
        blk = {
            'ln1_s': jnp.ones((1, D), jnp.float32),
            'ln1_b': jnp.zeros((1, D), jnp.float32),
            'wq': w(next(ki), (D, D)),   # qkv_bias=False -> no q/k/v biases
            'wk': w(next(ki), (D, D)),
            'wv': w(next(ki), (D, D)),
            'wo': w(next(ki), (D, D)),
            'bo': jnp.zeros((1, D), jnp.float32),
            'ln2_s': jnp.ones((1, D), jnp.float32),
            'ln2_b': jnp.zeros((1, D), jnp.float32),
            'w1': w(next(ki), (D, 4 * D)),
            'b1': jnp.zeros((1, 4 * D), jnp.float32),
            'w2': w(next(ki), (4 * D, D)),
            'b2': jnp.zeros((1, D), jnp.float32),
        }
        params['blocks'].append(blk)
    params['packed'] = pack_params(params)
    return params


def pack_params(params):
    """Stack per-layer weights along a leading n_layers axis and fuse Q/K/V."""
    blocks = params['blocks']
    stack = lambda name: jnp.stack([b[name] for b in blocks], axis=0)
    return {
        'ln1_s': stack('ln1_s'), 'ln1_b': stack('ln1_b'),          # (L, 1, D)
        'w_qkv': jnp.stack([jnp.concatenate([b['wq'], b['wk'], b['wv']], axis=1)
                            for b in blocks], axis=0),             # (L, D, 3D)
        'wo': stack('wo'), 'bo': stack('bo'),
        'ln2_s': stack('ln2_s'), 'ln2_b': stack('ln2_b'),
        'w1': stack('w1'), 'b1': stack('b1'),
        'w2': stack('w2'), 'b2': stack('b2'),
        'lnf_s': params['lnf_s'], 'lnf_b': params['lnf_b'],
        'w_out': params['w_out'],
    }


# --------------------------------- forward ----------------------------------
def gpt_forward(params, in_idx, cfg):
    B, T = in_idx.shape
    # embedding gather + positional add is glue (plain JAX); drop_emb is identity
    tok = jnp.take(params['tok_emb'], in_idx, axis=0)          # (B, T, D)
    pos = params['pos_emb'][:T][None, :, :]                    # (1, T, D)
    x = (tok + pos).astype(jnp.float32)
    return gpt_pallas_call(x, params['packed'], cfg)           # (B, T, V)


if __name__ == "__main__":
    key = jax.random.PRNGKey(0)
    pkey, dkey = jax.random.split(key)
    params = init_params(pkey, CFG)

    B, T = 2, 8
    in_idx = jax.random.randint(dkey, (B, T), 0, CFG['vocab_size'], dtype=jnp.int32)

    logits = gpt_forward(params, in_idx, CFG)
    jax.block_until_ready(logits)
    assert logits.shape == (B, T, CFG['vocab_size'])
    assert bool(jnp.all(jnp.isfinite(logits)))
    print("KERNEL_OK")
</pallas_src>

<mosaic_0001>
module attributes {stable_mosaic.version = 11 : i64} {
  func.func @gpt_kernel(%arg0: i32, %arg1: memref<1x8x32xf32, #tpu.memory_space<vmem>>, %arg2: memref<2x1x32xf32, #tpu.memory_space<vmem>>, %arg3: memref<2x1x32xf32, #tpu.memory_space<vmem>>, %arg4: memref<2x32x96xf32, #tpu.memory_space<vmem>>, %arg5: memref<2x32x32xf32, #tpu.memory_space<vmem>>, %arg6: memref<2x1x32xf32, #tpu.memory_space<vmem>>, %arg7: memref<2x1x32xf32, #tpu.memory_space<vmem>>, %arg8: memref<2x1x32xf32, #tpu.memory_space<vmem>>, %arg9: memref<2x32x128xf32, #tpu.memory_space<vmem>>, %arg10: memref<2x1x128xf32, #tpu.memory_space<vmem>>, %arg11: memref<2x128x32xf32, #tpu.memory_space<vmem>>, %arg12: memref<2x1x32xf32, #tpu.memory_space<vmem>>, %arg13: memref<1x32xf32, #tpu.memory_space<vmem>>, %arg14: memref<1x32xf32, #tpu.memory_space<vmem>>, %arg15: memref<32x256xf32, #tpu.memory_space<vmem>>, %arg16: memref<1x8x256xf32, #tpu.memory_space<vmem>>) attributes {dimension_semantics = [#tpu.dimension_semantics<parallel>], iteration_bounds = array<i64: 2>, scalar_prefetch = 0 : i64, scratch_operands = 0 : i64, tpu.core_type = #tpu.core_type<tc>, window_params = [{transform_indices = @transform_0, window_bounds = array<i64: 1, 8, 32>}, {pipeline_mode = #tpu.pipeline_mode<synchronous>, transform_indices = @transform_1, window_bounds = array<i64: 2, 1, 32>}, {pipeline_mode = #tpu.pipeline_mode<synchronous>, transform_indices = @transform_2, window_bounds = array<i64: 2, 1, 32>}, {pipeline_mode = #tpu.pipeline_mode<synchronous>, transform_indices = @transform_3, window_bounds = array<i64: 2, 32, 96>}, {pipeline_mode = #tpu.pipeline_mode<synchronous>, transform_indices = @transform_4, window_bounds = array<i64: 2, 32, 32>}, {pipeline_mode = #tpu.pipeline_mode<synchronous>, transform_indices = @transform_5, window_bounds = array<i64: 2, 1, 32>}, {pipeline_mode = #tpu.pipeline_mode<synchronous>, transform_indices = @transform_6, window_bounds = array<i64: 2, 1, 32>}, {pipeline_mode = #tpu.pipeline_mode<synchronous>, transform_indices = @transform_7, window_bounds = array<i64: 2, 1, 32>}, {pipeline_mode = #tpu.pipeline_mode<synchronous>, transform_indices = @transform_8, window_bounds = array<i64: 2, 32, 128>}, {pipeline_mode = #tpu.pipeline_mode<synchronous>, transform_indices = @transform_9, window_bounds = array<i64: 2, 1, 128>}, {pipeline_mode = #tpu.pipeline_mode<synchronous>, transform_indices = @transform_10, window_bounds = array<i64: 2, 128, 32>}, {pipeline_mode = #tpu.pipeline_mode<synchronous>, transform_indices = @transform_11, window_bounds = array<i64: 2, 1, 32>}, {pipeline_mode = #tpu.pipeline_mode<synchronous>, transform_indices = @transform_12, window_bounds = array<i64: 1, 32>}, {pipeline_mode = #tpu.pipeline_mode<synchronous>, transform_indices = @transform_13, window_bounds = array<i64: 1, 32>}, {pipeline_mode = #tpu.pipeline_mode<synchronous>, transform_indices = @transform_14, window_bounds = array<i64: 32, 256>}, {transform_indices = @transform_15, window_bounds = array<i64: 1, 8, 256>}]} {
    %c0 = arith.constant 0 : index
    %c0_0 = arith.constant 0 : index
    %c0_1 = arith.constant 0 : index
    %0 = vector.load %arg1[%c0, %c0_0, %c0_1] : memref<1x8x32xf32, #tpu.memory_space<vmem>>, vector<1x8x32xf32>
    %1 = vector.shape_cast %0 : vector<1x8x32xf32> to vector<8x32xf32>
    %2 = tpu.iota {dimensions = array<i32: 0>} : vector<8x8xi32>
    %3 = tpu.iota {dimensions = array<i32: 1>} : vector<8x8xi32>
    %4 = arith.cmpi sgt, %3, %2 : vector<8x8xi32>
    %c0_2 = arith.constant 0 : index
    %c0_3 = arith.constant 0 : index
    %c0_4 = arith.constant 0 : index
    %5 = vector.load %arg2[%c0_2, %c0_3, %c0_4] : memref<2x1x32xf32, #tpu.memory_space<vmem>>, vector<1x1x32xf32>
    %6 = vector.shape_cast %5 : vector<1x1x32xf32> to vector<1x32xf32>
    %c0_5 = arith.constant 0 : index
    %c0_6 = arith.constant 0 : index
    %c0_7 = arith.constant 0 : index
    %7 = vector.load %arg3[%c0_5, %c0_6, %c0_7] : memref<2x1x32xf32, #tpu.memory_space<vmem>>, vector<1x1x32xf32>
    %8 = vector.shape_cast %7 : vector<1x1x32xf32> to vector<1x32xf32>
    %cst = arith.constant dense<0.000000e+00> : vector<8xf32>
    %9 = vector.multi_reduction <add>, %1, %cst [1] : vector<8x32xf32> to vector<8xf32>
    %10 = vector.shape_cast %9 : vector<8xf32> to vector<8x1xf32>
    %cst_8 = arith.constant 3.200000e+01 : f32
    %11 = vector.broadcast %cst_8 : f32 to vector<8x1xf32>
    %12 = arith.divf %10, %11 : vector<8x1xf32>
    %13 = vector.broadcast %12 : vector<8x1xf32> to vector<8x32xf32>
    %14 = arith.subf %1, %13 : vector<8x32xf32>
    %15 = arith.mulf %14, %14 : vector<8x32xf32>
    %cst_9 = arith.constant dense<0.000000e+00> : vector<8xf32>
    %16 = vector.multi_reduction <add>, %15, %cst_9 [1] : vector<8x32xf32> to vector<8xf32>
    %17 = vector.shape_cast %16 : vector<8xf32> to vector<8x1xf32>
    %cst_10 = arith.constant 3.200000e+01 : f32
    %18 = vector.broadcast %cst_10 : f32 to vector<8x1xf32>
    %19 = arith.divf %17, %18 : vector<8x1xf32>
    %20 = vector.broadcast %12 : vector<8x1xf32> to vector<8x32xf32>
    %21 = arith.subf %1, %20 : vector<8x32xf32>
    %cst_11 = arith.constant 9.99999974E-6 : f32
    %22 = vector.broadcast %cst_11 : f32 to vector<8x1xf32>
    %23 = arith.addf %19, %22 : vector<8x1xf32>
    %24 = math.rsqrt %23 : vector<8x1xf32>
    %25 = vector.broadcast %24 : vector<8x1xf32> to vector<8x32xf32>
    %26 = arith.mulf %21, %25 : vector<8x32xf32>
    %27 = vector.broadcast %6 : vector<1x32xf32> to vector<8x32xf32>
    %28 = arith.mulf %27, %26 : vector<8x32xf32>
    %29 = vector.broadcast %8 : vector<1x32xf32> to vector<8x32xf32>
    %30 = arith.addf %28, %29 : vector<8x32xf32>
    %c0_12 = arith.constant 0 : index
    %c0_13 = arith.constant 0 : index
    %c0_14 = arith.constant 0 : index
    %31 = vector.load %arg4[%c0_12, %c0_13, %c0_14] : memref<2x32x96xf32, #tpu.memory_space<vmem>>, vector<1x32x96xf32>
    %32 = vector.shape_cast %31 : vector<1x32x96xf32> to vector<32x96xf32>
    %cst_15 = arith.constant dense<0.000000e+00> : vector<8x96xf32>
    %33 = tpu.matmul %30, %32, %cst_15 {dimension_numbers = #tpu.dot_dimension_numbers<[1], [0], [0], [1], [0, 0, 1, 1], [], []>} : vector<8x32xf32>, vector<32x96xf32>, vector<8x96xf32> -> vector<8x96xf32>
    %34 = vector.extract_strided_slice %33 {offsets = [0, 0], sizes = [8, 32], strides = [1, 1]} : vector<8x96xf32> to vector<8x32xf32>
    %cst_16 = arith.constant 0.353553385 : f32
    %35 = vector.broadcast %cst_16 : f32 to vector<8x32xf32>
    %36 = arith.mulf %34, %35 : vector<8x32xf32>
    %37 = vector.extract_strided_slice %33 {offsets = [0, 32], sizes = [8, 32], strides = [1, 1]} : vector<8x96xf32> to vector<8x32xf32>
    %38 = vector.extract_strided_slice %33 {offsets = [0, 64], sizes = [8, 32], strides = [1, 1]} : vector<8x96xf32> to vector<8x32xf32>
    %39 = vector.extract_strided_slice %36 {offsets = [0, 0], sizes = [8, 8], strides = [1, 1]} : vector<8x32xf32> to vector<8x8xf32>
    %40 = vector.extract_strided_slice %37 {offsets = [0, 0], sizes = [8, 8], strides = [1, 1]} : vector<8x32xf32> to vector<8x8xf32>
    %41 = vector.extract_strided_slice %38 {offsets = [0, 0], sizes = [8, 8], strides = [1, 1]} : vector<8x32xf32> to vector<8x8xf32>
    "tpu.trace_start"() <{level = 10 : i32, message = "qd,kd->qk"}> : () -> ()
    %cst_17 = arith.constant dense<0.000000e+00> : vector<8x8xf32>
    %42 = tpu.matmul %39, %40, %cst_17 {dimension_numbers = #tpu.dot_dimension_numbers<[1], [1], [0], [0], [0, 0, 1, 0], [], []>} : vector<8x8xf32>, vector<8x8xf32>, vector<8x8xf32> -> vector<8x8xf32>
    %cst_18 = arith.constant 0xFF800000 : f32
    "tpu.trace_stop"() : () -> ()
    %43 = vector.broadcast %cst_18 : f32 to vector<8x8xf32>
    %44 = arith.select %4, %43, %42 : vector<8x8xi1>, vector<8x8xf32>
    %cst_19 = arith.constant dense<0xFF800000> : vector<8xf32>
    %45 = vector.multi_reduction <maximumf>, %44, %cst_19 [1] : vector<8x8xf32> to vector<8xf32>
    %46 = vector.shape_cast %45 : vector<8xf32> to vector<8x1xf32>
    %47 = vector.broadcast %46 : vector<8x1xf32> to vector<8x8xf32>
    %48 = arith.subf %44, %47 : vector<8x8xf32>
    %49 = math.exp %48 : vector<8x8xf32>
    %cst_20 = arith.constant dense<0.000000e+00> : vector<8xf32>
    %50 = vector.multi_reduction <add>, %49, %cst_20 [1] : vector<8x8xf32> to vector<8xf32>
    %51 = vector.shape_cast %50 : vector<8xf32> to vector<8x1xf32>
    %52 = tpu.reciprocal %51 {approx = true} : vector<8x1xf32> -> vector<8x1xf32>
    %53 = vector.broadcast %52 : vector<8x1xf32> to vector<8x8xf32>
    %54 = arith.mulf %49, %53 : vector<8x8xf32>
    %cst_21 = arith.constant dense<0.000000e+00> : vector<8x8xf32>
    %55 = tpu.matmul %54, %41, %cst_21 {dimension_numbers = #tpu.dot_dimension_numbers<[1], [0], [0], [1], [0, 0, 1, 1], [], []>} : vector<8x8xf32>, vector<8x8xf32>, vector<8x8xf32> -> vector<8x8xf32>
    %56 = vector.extract_strided_slice %36 {offsets = [0, 8], sizes = [8, 8], strides = [1, 1]} : vector<8x32xf32> to vector<8x8xf32>
    %57 = vector.extract_strided_slice %37 {offsets = [0, 8], sizes = [8, 8], strides = [1, 1]} : vector<8x32xf32> to vector<8x8xf32>
    %58 = vector.extract_strided_slice %38 {offsets = [0, 8], sizes = [8, 8], strides = [1, 1]} : vector<8x32xf32> to vector<8x8xf32>
    "tpu.trace_start"() <{level = 10 : i32, message = "qd,kd->qk"}> : () -> ()
    %cst_22 = arith.constant dense<0.000000e+00> : vector<8x8xf32>
    %59 = tpu.matmul %56, %57, %cst_22 {dimension_numbers = #tpu.dot_dimension_numbers<[1], [1], [0], [0], [0, 0, 1, 0], [], []>} : vector<8x8xf32>, vector<8x8xf32>, vector<8x8xf32> -> vector<8x8xf32>
    %cst_23 = arith.constant 0xFF800000 : f32
    "tpu.trace_stop"() : () -> ()
    %60 = vector.broadcast %cst_23 : f32 to vector<8x8xf32>
    %61 = arith.select %4, %60, %59 : vector<8x8xi1>, vector<8x8xf32>
    %cst_24 = arith.constant dense<0xFF800000> : vector<8xf32>
    %62 = vector.multi_reduction <maximumf>, %61, %cst_24 [1] : vector<8x8xf32> to vector<8xf32>
    %63 = vector.shape_cast %62 : vector<8xf32> to vector<8x1xf32>
    %64 = vector.broadcast %63 : vector<8x1xf32> to vector<8x8xf32>
    %65 = arith.subf %61, %64 : vector<8x8xf32>
    %66 = math.exp %65 : vector<8x8xf32>
    %cst_25 = arith.constant dense<0.000000e+00> : vector<8xf32>
    %67 = vector.multi_reduction <add>, %66, %cst_25 [1] : vector<8x8xf32> to vector<8xf32>
    %68 = vector.shape_cast %67 : vector<8xf32> to vector<8x1xf32>
    %69 = tpu.reciprocal %68 {approx = true} : vector<8x1xf32> -> vector<8x1xf32>
    %70 = vector.broadcast %69 : vector<8x1xf32> to vector<8x8xf32>
    %71 = arith.mulf %66, %70 : vector<8x8xf32>
    %cst_26 = arith.constant dense<0.000000e+00> : vector<8x8xf32>
    %72 = tpu.matmul %71, %58, %cst_26 {dimension_numbers = #tpu.dot_dimension_numbers<[1], [0], [0], [1], [0, 0, 1, 1], [], []>} : vector<8x8xf32>, vector<8x8xf32>, vector<8x8xf32> -> vector<8x8xf32>
    %73 = vector.extract_strided_slice %36 {offsets = [0, 16], sizes = [8, 8], strides = [1, 1]} : vector<8x32xf32> to vector<8x8xf32>
    %74 = vector.extract_strided_slice %37 {offsets = [0, 16], sizes = [8, 8], strides = [1, 1]} : vector<8x32xf32> to vector<8x8xf32>
    %75 = vector.extract_strided_slice %38 {offsets = [0, 16], sizes = [8, 8], strides = [1, 1]} : vector<8x32xf32> to vector<8x8xf32>
    "tpu.trace_start"() <{level = 10 : i32, message = "qd,kd->qk"}> : () -> ()
    %cst_27 = arith.constant dense<0.000000e+00> : vector<8x8xf32>
    %76 = tpu.matmul %73, %74, %cst_27 {dimension_numbers = #tpu.dot_dimension_numbers<[1], [1], [0], [0], [0, 0, 1, 0], [], []>} : vector<8x8xf32>, vector<8x8xf32>, vector<8x8xf32> -> vector<8x8xf32>
    %cst_28 = arith.constant 0xFF800000 : f32
    "tpu.trace_stop"() : () -> ()
    %77 = vector.broadcast %cst_28 : f32 to vector<8x8xf32>
    %78 = arith.select %4, %77, %76 : vector<8x8xi1>, vector<8x8xf32>
    %cst_29 = arith.constant dense<0xFF800000> : vector<8xf32>
    %79 = vector.multi_reduction <maximumf>, %78, %cst_29 [1] : vector<8x8xf32> to vector<8xf32>
    %80 = vector.shape_cast %79 : vector<8xf32> to vector<8x1xf32>
    %81 = vector.broadcast %80 : vector<8x1xf32> to vector<8x8xf32>
    %82 = arith.subf %78, %81 : vector<8x8xf32>
    %83 = math.exp %82 : vector<8x8xf32>
    %cst_30 = arith.constant dense<0.000000e+00> : vector<8xf32>
    %84 = vector.multi_reduction <add>, %83, %cst_30 [1] : vector<8x8xf32> to vector<8xf32>
    %85 = vector.shape_cast %84 : vector<8xf32> to vector<8x1xf32>
    %86 = tpu.reciprocal %85 {approx = true} : vector<8x1xf32> -> vector<8x1xf32>
    %87 = vector.broadcast %86 : vector<8x1xf32> to vector<8x8xf32>
    %88 = arith.mulf %83, %87 : vector<8x8xf32>
    %cst_31 = arith.constant dense<0.000000e+00> : vector<8x8xf32>
    %89 = tpu.matmul %88, %75, %cst_31 {dimension_numbers = #tpu.dot_dimension_numbers<[1], [0], [0], [1], [0, 0, 1, 1], [], []>} : vector<8x8xf32>, vector<8x8xf32>, vector<8x8xf32> -> vector<8x8xf32>
    %90 = vector.extract_strided_slice %36 {offsets = [0, 24], sizes = [8, 8], strides = [1, 1]} : vector<8x32xf32> to vector<8x8xf32>
    %91 = vector.extract_strided_slice %37 {offsets = [0, 24], sizes = [8, 8], strides = [1, 1]} : vector<8x32xf32> to vector<8x8xf32>
    %92 = vector.extract_strided_slice %38 {offsets = [0, 24], sizes = [8, 8], strides = [1, 1]} : vector<8x32xf32> to vector<8x8xf32>
    "tpu.trace_start"() <{level = 10 : i32, message = "qd,kd->qk"}> : () -> ()
    %cst_32 = arith.constant dense<0.000000e+00> : vector<8x8xf32>
    %93 = tpu.matmul %90, %91, %cst_32 {dimension_numbers = #tpu.dot_dimension_numbers<[1], [1], [0], [0], [0, 0, 1, 0], [], []>} : vector<8x8xf32>, vector<8x8xf32>, vector<8x8xf32> -> vector<8x8xf32>
    %cst_33 = arith.constant 0xFF800000 : f32
    "tpu.trace_stop"() : () -> ()
    %94 = vector.broadcast %cst_33 : f32 to vector<8x8xf32>
    %95 = arith.select %4, %94, %93 : vector<8x8xi1>, vector<8x8xf32>
    %cst_34 = arith.constant dense<0xFF800000> : vector<8xf32>
    %96 = vector.multi_reduction <maximumf>, %95, %cst_34 [1] : vector<8x8xf32> to vector<8xf32>
    %97 = vector.shape_cast %96 : vector<8xf32> to vector<8x1xf32>
    %98 = vector.broadcast %97 : vector<8x1xf32> to vector<8x8xf32>
    %99 = arith.subf %95, %98 : vector<8x8xf32>
    %100 = math.exp %99 : vector<8x8xf32>
    %cst_35 = arith.constant dense<0.000000e+00> : vector<8xf32>
    %101 = vector.multi_reduction <add>, %100, %cst_35 [1] : vector<8x8xf32> to vector<8xf32>
    %102 = vector.shape_cast %101 : vector<8xf32> to vector<8x1xf32>
    %103 = tpu.reciprocal %102 {approx = true} : vector<8x1xf32> -> vector<8x1xf32>
    %104 = vector.broadcast %103 : vector<8x1xf32> to vector<8x8xf32>
    %105 = arith.mulf %100, %104 : vector<8x8xf32>
    %cst_36 = arith.constant dense<0.000000e+00> : vector<8x8xf32>
    %106 = tpu.matmul %105, %92, %cst_36 {dimension_numbers = #tpu.dot_dimension_numbers<[1], [0], [0], [1], [0, 0, 1, 1], [], []>} : vector<8x8xf32>, vector<8x8xf32>, vector<8x8xf32> -> vector<8x8xf32>
    %107 = tpu.concatenate %55, %72, %89, %106 in 1 : vector<8x8xf32>, vector<8x8xf32>, vector<8x8xf32>, vector<8x8xf32> -> vector<8x32xf32>
    %c0_37 = arith.constant 0 : index
    %c0_38 = arith.constant 0 : index
    %c0_39 = arith.constant 0 : index
    %108 = vector.load %arg5[%c0_37, %c0_38, %c0_39] : memref<2x32x32xf32, #tpu.memory_space<vmem>>, vector<1x32x32xf32>
    %109 = vector.shape_cast %108 : vector<1x32x32xf32> to vector<32x32xf32>
    %cst_40 = arith.constant dense<0.000000e+00> : vector<8x32xf32>
    %110 = tpu.matmul %107, %109, %cst_40 {dimension_numbers = #tpu.dot_dimension_numbers<[1], [0], [0], [1], [0, 0, 1, 1], [], []>} : vector<8x32xf32>, vector<32x32xf32>, vector<8x32xf32> -> vector<8x32xf32>
    %c0_41 = arith.constant 0 : index
    %c0_42 = arith.constant 0 : index
    %c0_43 = arith.constant 0 : index
    %111 = vector.load %arg6[%c0_41, %c0_42, %c0_43] : memref<2x1x32xf32, #tpu.memory_space<vmem>>, vector<1x1x32xf32>
    %112 = vector.shape_cast %111 : vector<1x1x32xf32> to vector<1x32xf32>
    %113 = vector.broadcast %112 : vector<1x32xf32> to vector<8x32xf32>
    %114 = arith.addf %110, %113 : vector<8x32xf32>
    %115 = arith.addf %114, %1 : vector<8x32xf32>
    %c0_44 = arith.constant 0 : index
    %c0_45 = arith.constant 0 : index
    %c0_46 = arith.constant 0 : index
    %116 = vector.load %arg7[%c0_44, %c0_45, %c0_46] : memref<2x1x32xf32, #tpu.memory_space<vmem>>, vector<1x1x32xf32>
    %117 = vector.shape_cast %116 : vector<1x1x32xf32> to vector<1x32xf32>
    %c0_47 = arith.constant 0 : index
    %c0_48 = arith.constant 0 : index
    %c0_49 = arith.constant 0 : index
    %118 = vector.load %arg8[%c0_47, %c0_48, %c0_49] : memref<2x1x32xf32, #tpu.memory_space<vmem>>, vector<1x1x32xf32>
    %119 = vector.shape_cast %118 : vector<1x1x32xf32> to vector<1x32xf32>
    %cst_50 = arith.constant dense<0.000000e+00> : vector<8xf32>
    %120 = vector.multi_reduction <add>, %115, %cst_50 [1] : vector<8x32xf32> to vector<8xf32>
    %121 = vector.shape_cast %120 : vector<8xf32> to vector<8x1xf32>
    %cst_51 = arith.constant 3.200000e+01 : f32
    %122 = vector.broadcast %cst_51 : f32 to vector<8x1xf32>
    %123 = arith.divf %121, %122 : vector<8x1xf32>
    %124 = vector.broadcast %123 : vector<8x1xf32> to vector<8x32xf32>
    %125 = arith.subf %115, %124 : vector<8x32xf32>
    %126 = arith.mulf %125, %125 : vector<8x32xf32>
    %cst_52 = arith.constant dense<0.000000e+00> : vector<8xf32>
    %127 = vector.multi_reduction <add>, %126, %cst_52 [1] : vector<8x32xf32> to vector<8xf32>
    %128 = vector.shape_cast %127 : vector<8xf32> to vector<8x1xf32>
    %cst_53 = arith.constant 3.200000e+01 : f32
    %129 = vector.broadcast %cst_53 : f32 to vector<8x1xf32>
    %130 = arith.divf %128, %129 : vector<8x1xf32>
    %131 = vector.broadcast %123 : vector<8x1xf32> to vector<8x32xf32>
    %132 = arith.subf %115, %131 : vector<8x32xf32>
    %cst_54 = arith.constant 9.99999974E-6 : f32
    %133 = vector.broadcast %cst_54 : f32 to vector<8x1xf32>
    %134 = arith.addf %130, %133 : vector<8x1xf32>
    %135 = math.rsqrt %134 : vector<8x1xf32>
    %136 = vector.broadcast %135 : vector<8x1xf32> to vector<8x32xf32>
    %137 = arith.mulf %132, %136 : vector<8x32xf32>
    %138 = vector.broadcast %117 : vector<1x32xf32> to vector<8x32xf32>
    %139 = arith.mulf %138, %137 : vector<8x32xf32>
    %140 = vector.broadcast %119 : vector<1x32xf32> to vector<8x32xf32>
    %141 = arith.addf %139, %140 : vector<8x32xf32>
    %c0_55 = arith.constant 0 : index
    %c0_56 = arith.constant 0 : index
    %c0_57 = arith.constant 0 : index
    %142 = vector.load %arg9[%c0_55, %c0_56, %c0_57] : memref<2x32x128xf32, #tpu.memory_space<vmem>>, vector<1x32x128xf32>
    %143 = vector.shape_cast %142 : vector<1x32x128xf32> to vector<32x128xf32>
    %cst_58 = arith.constant dense<0.000000e+00> : vector<8x128xf32>
    %144 = tpu.matmul %141, %143, %cst_58 {dimension_numbers = #tpu.dot_dimension_numbers<[1], [0], [0], [1], [0, 0, 1, 1], [], []>} : vector<8x32xf32>, vector<32x128xf32>, vector<8x128xf32> -> vector<8x128xf32>
    %c0_59 = arith.constant 0 : index
    %c0_60 = arith.constant 0 : index
    %c0_61 = arith.constant 0 : index
    %145 = vector.load %arg10[%c0_59, %c0_60, %c0_61] : memref<2x1x128xf32, #tpu.memory_space<vmem>>, vector<1x1x128xf32>
    %146 = vector.shape_cast %145 : vector<1x1x128xf32> to vector<1x128xf32>
    %147 = vector.broadcast %146 : vector<1x128xf32> to vector<8x128xf32>
    %148 = arith.addf %144, %147 : vector<8x128xf32>
    %cst_62 = arith.constant 5.000000e-01 : f32
    %149 = vector.broadcast %cst_62 : f32 to vector<8x128xf32>
    %150 = arith.mulf %149, %148 : vector<8x128xf32>
    %cst_63 = arith.constant 0.636619746 : f32
    %151 = math.sqrt %cst_63 : f32
    %152 = arith.mulf %148, %148 : vector<8x128xf32>
    %153 = arith.mulf %148, %152 : vector<8x128xf32>
    %cst_64 = arith.constant 4.471500e-02 : f32
    %154 = vector.broadcast %cst_64 : f32 to vector<8x128xf32>
    %155 = arith.mulf %154, %153 : vector<8x128xf32>
    %156 = arith.addf %148, %155 : vector<8x128xf32>
    %157 = vector.broadcast %151 : f32 to vector<8x128xf32>
    %158 = arith.mulf %157, %156 : vector<8x128xf32>
    %159 = math.tanh %158 : vector<8x128xf32>
    %cst_65 = arith.constant 1.000000e+00 : f32
    %160 = vector.broadcast %cst_65 : f32 to vector<8x128xf32>
    %161 = arith.addf %160, %159 : vector<8x128xf32>
    %162 = arith.mulf %150, %161 : vector<8x128xf32>
    %c0_66 = arith.constant 0 : index
    %c0_67 = arith.constant 0 : index
    %c0_68 = arith.constant 0 : index
    %163 = vector.load %arg11[%c0_66, %c0_67, %c0_68] : memref<2x128x32xf32, #tpu.memory_space<vmem>>, vector<1x128x32xf32>
    %164 = vector.shape_cast %163 : vector<1x128x32xf32> to vector<128x32xf32>
    %cst_69 = arith.constant dense<0.000000e+00> : vector<8x32xf32>
    %165 = tpu.matmul %162, %164, %cst_69 {dimension_numbers = #tpu.dot_dimension_numbers<[1], [0], [0], [1], [0, 0, 1, 1], [], []>} : vector<8x128xf32>, vector<128x32xf32>, vector<8x32xf32> -> vector<8x32xf32>
    %c0_70 = arith.constant 0 : index
    %c0_71 = arith.constant 0 : index
    %c0_72 = arith.constant 0 : index
    %166 = vector.load %arg12[%c0_70, %c0_71, %c0_72] : memref<2x1x32xf32, #tpu.memory_space<vmem>>, vector<1x1x32xf32>
    %167 = vector.shape_cast %166 : vector<1x1x32xf32> to vector<1x32xf32>
    %168 = vector.broadcast %167 : vector<1x32xf32> to vector<8x32xf32>
    %169 = arith.addf %165, %168 : vector<8x32xf32>
    %170 = arith.addf %169, %115 : vector<8x32xf32>
    %c1 = arith.constant 1 : index
    %c0_73 = arith.constant 0 : index
    %c0_74 = arith.constant 0 : index
    %171 = vector.load %arg2[%c1, %c0_73, %c0_74] : memref<2x1x32xf32, #tpu.memory_space<vmem>>, vector<1x1x32xf32>
    %172 = vector.shape_cast %171 : vector<1x1x32xf32> to vector<1x32xf32>
    %c1_75 = arith.constant 1 : index
    %c0_76 = arith.constant 0 : index
    %c0_77 = arith.constant 0 : index
    %173 = vector.load %arg3[%c1_75, %c0_76, %c0_77] : memref<2x1x32xf32, #tpu.memory_space<vmem>>, vector<1x1x32xf32>
    %174 = vector.shape_cast %173 : vector<1x1x32xf32> to vector<1x32xf32>
    %cst_78 = arith.constant dense<0.000000e+00> : vector<8xf32>
    %175 = vector.multi_reduction <add>, %170, %cst_78 [1] : vector<8x32xf32> to vector<8xf32>
    %176 = vector.shape_cast %175 : vector<8xf32> to vector<8x1xf32>
    %cst_79 = arith.constant 3.200000e+01 : f32
    %177 = vector.broadcast %cst_79 : f32 to vector<8x1xf32>
    %178 = arith.divf %176, %177 : vector<8x1xf32>
    %179 = vector.broadcast %178 : vector<8x1xf32> to vector<8x32xf32>
    %180 = arith.subf %170, %179 : vector<8x32xf32>
    %181 = arith.mulf %180, %180 : vector<8x32xf32>
    %cst_80 = arith.constant dense<0.000000e+00> : vector<8xf32>
    %182 = vector.multi_reduction <add>, %181, %cst_80 [1] : vector<8x32xf32> to vector<8xf32>
    %183 = vector.shape_cast %182 : vector<8xf32> to vector<8x1xf32>
    %cst_81 = arith.constant 3.200000e+01 : f32
    %184 = vector.broadcast %cst_81 : f32 to vector<8x1xf32>
    %185 = arith.divf %183, %184 : vector<8x1xf32>
    %186 = vector.broadcast %178 : vector<8x1xf32> to vector<8x32xf32>
    %187 = arith.subf %170, %186 : vector<8x32xf32>
    %cst_82 = arith.constant 9.99999974E-6 : f32
    %188 = vector.broadcast %cst_82 : f32 to vector<8x1xf32>
    %189 = arith.addf %185, %188 : vector<8x1xf32>
    %190 = math.rsqrt %189 : vector<8x1xf32>
    %191 = vector.broadcast %190 : vector<8x1xf32> to vector<8x32xf32>
    %192 = arith.mulf %187, %191 : vector<8x32xf32>
    %193 = vector.broadcast %172 : vector<1x32xf32> to vector<8x32xf32>
    %194 = arith.mulf %193, %192 : vector<8x32xf32>
    %195 = vector.broadcast %174 : vector<1x32xf32> to vector<8x32xf32>
    %196 = arith.addf %194, %195 : vector<8x32xf32>
    %c1_83 = arith.constant 1 : index
    %c0_84 = arith.constant 0 : index
    %c0_85 = arith.constant 0 : index
    %197 = vector.load %arg4[%c1_83, %c0_84, %c0_85] : memref<2x32x96xf32, #tpu.memory_space<vmem>>, vector<1x32x96xf32>
    %198 = vector.shape_cast %197 : vector<1x32x96xf32> to vector<32x96xf32>
    %cst_86 = arith.constant dense<0.000000e+00> : vector<8x96xf32>
    %199 = tpu.matmul %196, %198, %cst_86 {dimension_numbers = #tpu.dot_dimension_numbers<[1], [0], [0], [1], [0, 0, 1, 1], [], []>} : vector<8x32xf32>, vector<32x96xf32>, vector<8x96xf32> -> vector<8x96xf32>
    %200 = vector.extract_strided_slice %199 {offsets = [0, 0], sizes = [8, 32], strides = [1, 1]} : vector<8x96xf32> to vector<8x32xf32>
    %cst_87 = arith.constant 0.353553385 : f32
    %201 = vector.broadcast %cst_87 : f32 to vector<8x32xf32>
    %202 = arith.mulf %200, %201 : vector<8x32xf32>
    %203 = vector.extract_strided_slice %199 {offsets = [0, 32], sizes = [8, 32], strides = [1, 1]} : vector<8x96xf32> to vector<8x32xf32>
    %204 = vector.extract_strided_slice %199 {offsets = [0, 64], sizes = [8, 32], strides = [1, 1]} : vector<8x96xf32> to vector<8x32xf32>
    %205 = vector.extract_strided_slice %202 {offsets = [0, 0], sizes = [8, 8], strides = [1, 1]} : vector<8x32xf32> to vector<8x8xf32>
    %206 = vector.extract_strided_slice %203 {offsets = [0, 0], sizes = [8, 8], strides = [1, 1]} : vector<8x32xf32> to vector<8x8xf32>
    %207 = vector.extract_strided_slice %204 {offsets = [0, 0], sizes = [8, 8], strides = [1, 1]} : vector<8x32xf32> to vector<8x8xf32>
    "tpu.trace_start"() <{level = 10 : i32, message = "qd,kd->qk"}> : () -> ()
    %cst_88 = arith.constant dense<0.000000e+00> : vector<8x8xf32>
    %208 = tpu.matmul %205, %206, %cst_88 {dimension_numbers = #tpu.dot_dimension_numbers<[1], [1], [0], [0], [0, 0, 1, 0], [], []>} : vector<8x8xf32>, vector<8x8xf32>, vector<8x8xf32> -> vector<8x8xf32>
    %cst_89 = arith.constant 0xFF800000 : f32
    "tpu.trace_stop"() : () -> ()
    %209 = vector.broadcast %cst_89 : f32 to vector<8x8xf32>
    %210 = arith.select %4, %209, %208 : vector<8x8xi1>, vector<8x8xf32>
    %cst_90 = arith.constant dense<0xFF800000> : vector<8xf32>
    %211 = vector.multi_reduction <maximumf>, %210, %cst_90 [1] : vector<8x8xf32> to vector<8xf32>
    %212 = vector.shape_cast %211 : vector<8xf32> to vector<8x1xf32>
    %213 = vector.broadcast %212 : vector<8x1xf32> to vector<8x8xf32>
    %214 = arith.subf %210, %213 : vector<8x8xf32>
    %215 = math.exp %214 : vector<8x8xf32>
    %cst_91 = arith.constant dense<0.000000e+00> : vector<8xf32>
    %216 = vector.multi_reduction <add>, %215, %cst_91 [1] : vector<8x8xf32> to vector<8xf32>
    %217 = vector.shape_cast %216 : vector<8xf32> to vector<8x1xf32>
    %218 = tpu.reciprocal %217 {approx = true} : vector<8x1xf32> -> vector<8x1xf32>
    %219 = vector.broadcast %218 : vector<8x1xf32> to vector<8x8xf32>
    %220 = arith.mulf %215, %219 : vector<8x8xf32>
    %cst_92 = arith.constant dense<0.000000e+00> : vector<8x8xf32>
    %221 = tpu.matmul %220, %207, %cst_92 {dimension_numbers = #tpu.dot_dimension_numbers<[1], [0], [0], [1], [0, 0, 1, 1], [], []>} : vector<8x8xf32>, vector<8x8xf32>, vector<8x8xf32> -> vector<8x8xf32>
    %222 = vector.extract_strided_slice %202 {offsets = [0, 8], sizes = [8, 8], strides = [1, 1]} : vector<8x32xf32> to vector<8x8xf32>
    %223 = vector.extract_strided_slice %203 {offsets = [0, 8], sizes = [8, 8], strides = [1, 1]} : vector<8x32xf32> to vector<8x8xf32>
    %224 = vector.extract_strided_slice %204 {offsets = [0, 8], sizes = [8, 8], strides = [1, 1]} : vector<8x32xf32> to vector<8x8xf32>
    "tpu.trace_start"() <{level = 10 : i32, message = "qd,kd->qk"}> : () -> ()
    %cst_93 = arith.constant dense<0.000000e+00> : vector<8x8xf32>
    %225 = tpu.matmul %222, %223, %cst_93 {dimension_numbers = #tpu.dot_dimension_numbers<[1], [1], [0], [0], [0, 0, 1, 0], [], []>} : vector<8x8xf32>, vector<8x8xf32>, vector<8x8xf32> -> vector<8x8xf32>
    %cst_94 = arith.constant 0xFF800000 : f32
    "tpu.trace_stop"() : () -> ()
    %226 = vector.broadcast %cst_94 : f32 to vector<8x8xf32>
    %227 = arith.select %4, %226, %225 : vector<8x8xi1>, vector<8x8xf32>
    %cst_95 = arith.constant dense<0xFF800000> : vector<8xf32>
    %228 = vector.multi_reduction <maximumf>, %227, %cst_95 [1] : vector<8x8xf32> to vector<8xf32>
    %229 = vector.shape_cast %228 : vector<8xf32> to vector<8x1xf32>
    %230 = vector.broadcast %229 : vector<8x1xf32> to vector<8x8xf32>
    %231 = arith.subf %227, %230 : vector<8x8xf32>
    %232 = math.exp %231 : vector<8x8xf32>
    %cst_96 = arith.constant dense<0.000000e+00> : vector<8xf32>
    %233 = vector.multi_reduction <add>, %232, %cst_96 [1] : vector<8x8xf32> to vector<8xf32>
    %234 = vector.shape_cast %233 : vector<8xf32> to vector<8x1xf32>
    %235 = tpu.reciprocal %234 {approx = true} : vector<8x1xf32> -> vector<8x1xf32>
    %236 = vector.broadcast %235 : vector<8x1xf32> to vector<8x8xf32>
    %237 = arith.mulf %232, %236 : vector<8x8xf32>
    %cst_97 = arith.constant dense<0.000000e+00> : vector<8x8xf32>
    %238 = tpu.matmul %237, %224, %cst_97 {dimension_numbers = #tpu.dot_dimension_numbers<[1], [0], [0], [1], [0, 0, 1, 1], [], []>} : vector<8x8xf32>, vector<8x8xf32>, vector<8x8xf32> -> vector<8x8xf32>
    %239 = vector.extract_strided_slice %202 {offsets = [0, 16], sizes = [8, 8], strides = [1, 1]} : vector<8x32xf32> to vector<8x8xf32>
    %240 = vector.extract_strided_slice %203 {offsets = [0, 16], sizes = [8, 8], strides = [1, 1]} : vector<8x32xf32> to vector<8x8xf32>
    %241 = vector.extract_strided_slice %204 {offsets = [0, 16], sizes = [8, 8], strides = [1, 1]} : vector<8x32xf32> to vector<8x8xf32>
    "tpu.trace_start"() <{level = 10 : i32, message = "qd,kd->qk"}> : () -> ()
    %cst_98 = arith.constant dense<0.000000e+00> : vector<8x8xf32>
    %242 = tpu.matmul %239, %240, %cst_98 {dimension_numbers = #tpu.dot_dimension_numbers<[1], [1], [0], [0], [0, 0, 1, 0], [], []>} : vector<8x8xf32>, vector<8x8xf32>, vector<8x8xf32> -> vector<8x8xf32>
    %cst_99 = arith.constant 0xFF800000 : f32
    "tpu.trace_stop"() : () -> ()
    %243 = vector.broadcast %cst_99 : f32 to vector<8x8xf32>
    %244 = arith.select %4, %243, %242 : vector<8x8xi1>, vector<8x8xf32>
    %cst_100 = arith.constant dense<0xFF800000> : vector<8xf32>
    %245 = vector.multi_reduction <maximumf>, %244, %cst_100 [1] : vector<8x8xf32> to vector<8xf32>
    %246 = vector.shape_cast %245 : vector<8xf32> to vector<8x1xf32>
    %247 = vector.broadcast %246 : vector<8x1xf32> to vector<8x8xf32>
    %248 = arith.subf %244, %247 : vector<8x8xf32>
    %249 = math.exp %248 : vector<8x8xf32>
    %cst_101 = arith.constant dense<0.000000e+00> : vector<8xf32>
    %250 = vector.multi_reduction <add>, %249, %cst_101 [1] : vector<8x8xf32> to vector<8xf32>
    %251 = vector.shape_cast %250 : vector<8xf32> to vector<8x1xf32>
    %252 = tpu.reciprocal %251 {approx = true} : vector<8x1xf32> -> vector<8x1xf32>
    %253 = vector.broadcast %252 : vector<8x1xf32> to vector<8x8xf32>
    %254 = arith.mulf %249, %253 : vector<8x8xf32>
    %cst_102 = arith.constant dense<0.000000e+00> : vector<8x8xf32>
    %255 = tpu.matmul %254, %241, %cst_102 {dimension_numbers = #tpu.dot_dimension_numbers<[1], [0], [0], [1], [0, 0, 1, 1], [], []>} : vector<8x8xf32>, vector<8x8xf32>, vector<8x8xf32> -> vector<8x8xf32>
    %256 = vector.extract_strided_slice %202 {offsets = [0, 24], sizes = [8, 8], strides = [1, 1]} : vector<8x32xf32> to vector<8x8xf32>
    %257 = vector.extract_strided_slice %203 {offsets = [0, 24], sizes = [8, 8], strides = [1, 1]} : vector<8x32xf32> to vector<8x8xf32>
    %258 = vector.extract_strided_slice %204 {offsets = [0, 24], sizes = [8, 8], strides = [1, 1]} : vector<8x32xf32> to vector<8x8xf32>
    "tpu.trace_start"() <{level = 10 : i32, message = "qd,kd->qk"}> : () -> ()
    %cst_103 = arith.constant dense<0.000000e+00> : vector<8x8xf32>
    %259 = tpu.matmul %256, %257, %cst_103 {dimension_numbers = #tpu.dot_dimension_numbers<[1], [1], [0], [0], [0, 0, 1, 0], [], []>} : vector<8x8xf32>, vector<8x8xf32>, vector<8x8xf32> -> vector<8x8xf32>
    %cst_104 = arith.constant 0xFF800000 : f32
    "tpu.trace_stop"() : () -> ()
    %260 = vector.broadcast %cst_104 : f32 to vector<8x8xf32>
    %261 = arith.select %4, %260, %259 : vector<8x8xi1>, vector<8x8xf32>
    %cst_105 = arith.constant dense<0xFF800000> : vector<8xf32>
    %262 = vector.multi_reduction <maximumf>, %261, %cst_105 [1] : vector<8x8xf32> to vector<8xf32>
    %263 = vector.shape_cast %262 : vector<8xf32> to vector<8x1xf32>
    %264 = vector.broadcast %263 : vector<8x1xf32> to vector<8x8xf32>
    %265 = arith.subf %261, %264 : vector<8x8xf32>
    %266 = math.exp %265 : vector<8x8xf32>
    %cst_106 = arith.constant dense<0.000000e+00> : vector<8xf32>
    %267 = vector.multi_reduction <add>, %266, %cst_106 [1] : vector<8x8xf32> to vector<8xf32>
    %268 = vector.shape_cast %267 : vector<8xf32> to vector<8x1xf32>
    %269 = tpu.reciprocal %268 {approx = true} : vector<8x1xf32> -> vector<8x1xf32>
    %270 = vector.broadcast %269 : vector<8x1xf32> to vector<8x8xf32>
    %271 = arith.mulf %266, %270 : vector<8x8xf32>
    %cst_107 = arith.constant dense<0.000000e+00> : vector<8x8xf32>
    %272 = tpu.matmul %271, %258, %cst_107 {dimension_numbers = #tpu.dot_dimension_numbers<[1], [0], [0], [1], [0, 0, 1, 1], [], []>} : vector<8x8xf32>, vector<8x8xf32>, vector<8x8xf32> -> vector<8x8xf32>
    %273 = tpu.concatenate %221, %238, %255, %272 in 1 : vector<8x8xf32>, vector<8x8xf32>, vector<8x8xf32>, vector<8x8xf32> -> vector<8x32xf32>
    %c1_108 = arith.constant 1 : index
    %c0_109 = arith.constant 0 : index
    %c0_110 = arith.constant 0 : index
    %274 = vector.load %arg5[%c1_108, %c0_109, %c0_110] : memref<2x32x32xf32, #tpu.memory_space<vmem>>, vector<1x32x32xf32>
    %275 = vector.shape_cast %274 : vector<1x32x32xf32> to vector<32x32xf32>
    %cst_111 = arith.constant dense<0.000000e+00> : vector<8x32xf32>
    %276 = tpu.matmul %273, %275, %cst_111 {dimension_numbers = #tpu.dot_dimension_numbers<[1], [0], [0], [1], [0, 0, 1, 1], [], []>} : vector<8x32xf32>, vector<32x32xf32>, vector<8x32xf32> -> vector<8x32xf32>
    %c1_112 = arith.constant 1 : index
    %c0_113 = arith.constant 0 : index
    %c0_114 = arith.constant 0 : index
    %277 = vector.load %arg6[%c1_112, %c0_113, %c0_114] : memref<2x1x32xf32, #tpu.memory_space<vmem>>, vector<1x1x32xf32>
    %278 = vector.shape_cast %277 : vector<1x1x32xf32> to vector<1x32xf32>
    %279 = vector.broadcast %278 : vector<1x32xf32> to vector<8x32xf32>
    %280 = arith.addf %276, %279 : vector<8x32xf32>
    %281 = arith.addf %280, %170 : vector<8x32xf32>
    %c1_115 = arith.constant 1 : index
    %c0_116 = arith.constant 0 : index
    %c0_117 = arith.constant 0 : index
    %282 = vector.load %arg7[%c1_115, %c0_116, %c0_117] : memref<2x1x32xf32, #tpu.memory_space<vmem>>, vector<1x1x32xf32>
    %283 = vector.shape_cast %282 : vector<1x1x32xf32> to vector<1x32xf32>
    %c1_118 = arith.constant 1 : index
    %c0_119 = arith.constant 0 : index
    %c0_120 = arith.constant 0 : index
    %284 = vector.load %arg8[%c1_118, %c0_119, %c0_120] : memref<2x1x32xf32, #tpu.memory_space<vmem>>, vector<1x1x32xf32>
    %285 = vector.shape_cast %284 : vector<1x1x32xf32> to vector<1x32xf32>
    %cst_121 = arith.constant dense<0.000000e+00> : vector<8xf32>
    %286 = vector.multi_reduction <add>, %281, %cst_121 [1] : vector<8x32xf32> to vector<8xf32>
    %287 = vector.shape_cast %286 : vector<8xf32> to vector<8x1xf32>
    %cst_122 = arith.constant 3.200000e+01 : f32
    %288 = vector.broadcast %cst_122 : f32 to vector<8x1xf32>
    %289 = arith.divf %287, %288 : vector<8x1xf32>
    %290 = vector.broadcast %289 : vector<8x1xf32> to vector<8x32xf32>
    %291 = arith.subf %281, %290 : vector<8x32xf32>
    %292 = arith.mulf %291, %291 : vector<8x32xf32>
    %cst_123 = arith.constant dense<0.000000e+00> : vector<8xf32>
    %293 = vector.multi_reduction <add>, %292, %cst_123 [1] : vector<8x32xf32> to vector<8xf32>
    %294 = vector.shape_cast %293 : vector<8xf32> to vector<8x1xf32>
    %cst_124 = arith.constant 3.200000e+01 : f32
    %295 = vector.broadcast %cst_124 : f32 to vector<8x1xf32>
    %296 = arith.divf %294, %295 : vector<8x1xf32>
    %297 = vector.broadcast %289 : vector<8x1xf32> to vector<8x32xf32>
    %298 = arith.subf %281, %297 : vector<8x32xf32>
    %cst_125 = arith.constant 9.99999974E-6 : f32
    %299 = vector.broadcast %cst_125 : f32 to vector<8x1xf32>
    %300 = arith.addf %296, %299 : vector<8x1xf32>
    %301 = math.rsqrt %300 : vector<8x1xf32>
    %302 = vector.broadcast %301 : vector<8x1xf32> to vector<8x32xf32>
    %303 = arith.mulf %298, %302 : vector<8x32xf32>
    %304 = vector.broadcast %283 : vector<1x32xf32> to vector<8x32xf32>
    %305 = arith.mulf %304, %303 : vector<8x32xf32>
    %306 = vector.broadcast %285 : vector<1x32xf32> to vector<8x32xf32>
    %307 = arith.addf %305, %306 : vector<8x32xf32>
    %c1_126 = arith.constant 1 : index
    %c0_127 = arith.constant 0 : index
    %c0_128 = arith.constant 0 : index
    %308 = vector.load %arg9[%c1_126, %c0_127, %c0_128] : memref<2x32x128xf32, #tpu.memory_space<vmem>>, vector<1x32x128xf32>
    %309 = vector.shape_cast %308 : vector<1x32x128xf32> to vector<32x128xf32>
    %cst_129 = arith.constant dense<0.000000e+00> : vector<8x128xf32>
    %310 = tpu.matmul %307, %309, %cst_129 {dimension_numbers = #tpu.dot_dimension_numbers<[1], [0], [0], [1], [0, 0, 1, 1], [], []>} : vector<8x32xf32>, vector<32x128xf32>, vector<8x128xf32> -> vector<8x128xf32>
    %c1_130 = arith.constant 1 : index
    %c0_131 = arith.constant 0 : index
    %c0_132 = arith.constant 0 : index
    %311 = vector.load %arg10[%c1_130, %c0_131, %c0_132] : memref<2x1x128xf32, #tpu.memory_space<vmem>>, vector<1x1x128xf32>
    %312 = vector.shape_cast %311 : vector<1x1x128xf32> to vector<1x128xf32>
    %313 = vector.broadcast %312 : vector<1x128xf32> to vector<8x128xf32>
    %314 = arith.addf %310, %313 : vector<8x128xf32>
    %cst_133 = arith.constant 5.000000e-01 : f32
    %315 = vector.broadcast %cst_133 : f32 to vector<8x128xf32>
    %316 = arith.mulf %315, %314 : vector<8x128xf32>
    %cst_134 = arith.constant 0.636619746 : f32
    %317 = math.sqrt %cst_134 : f32
    %318 = arith.mulf %314, %314 : vector<8x128xf32>
    %319 = arith.mulf %314, %318 : vector<8x128xf32>
    %cst_135 = arith.constant 4.471500e-02 : f32
    %320 = vector.broadcast %cst_135 : f32 to vector<8x128xf32>
    %321 = arith.mulf %320, %319 : vector<8x128xf32>
    %322 = arith.addf %314, %321 : vector<8x128xf32>
    %323 = vector.broadcast %317 : f32 to vector<8x128xf32>
    %324 = arith.mulf %323, %322 : vector<8x128xf32>
    %325 = math.tanh %324 : vector<8x128xf32>
    %cst_136 = arith.constant 1.000000e+00 : f32
    %326 = vector.broadcast %cst_136 : f32 to vector<8x128xf32>
    %327 = arith.addf %326, %325 : vector<8x128xf32>
    %328 = arith.mulf %316, %327 : vector<8x128xf32>
    %c1_137 = arith.constant 1 : index
    %c0_138 = arith.constant 0 : index
    %c0_139 = arith.constant 0 : index
    %329 = vector.load %arg11[%c1_137, %c0_138, %c0_139] : memref<2x128x32xf32, #tpu.memory_space<vmem>>, vector<1x128x32xf32>
    %330 = vector.shape_cast %329 : vector<1x128x32xf32> to vector<128x32xf32>
    %cst_140 = arith.constant dense<0.000000e+00> : vector<8x32xf32>
    %331 = tpu.matmul %328, %330, %cst_140 {dimension_numbers = #tpu.dot_dimension_numbers<[1], [0], [0], [1], [0, 0, 1, 1], [], []>} : vector<8x128xf32>, vector<128x32xf32>, vector<8x32xf32> -> vector<8x32xf32>
    %c1_141 = arith.constant 1 : index
    %c0_142 = arith.constant 0 : index
    %c0_143 = arith.constant 0 : index
    %332 = vector.load %arg12[%c1_141, %c0_142, %c0_143] : memref<2x1x32xf32, #tpu.memory_space<vmem>>, vector<1x1x32xf32>
    %333 = vector.shape_cast %332 : vector<1x1x32xf32> to vector<1x32xf32>
    %334 = vector.broadcast %333 : vector<1x32xf32> to vector<8x32xf32>
    %335 = arith.addf %331, %334 : vector<8x32xf32>
    %336 = arith.addf %335, %281 : vector<8x32xf32>
    %c0_144 = arith.constant 0 : index
    %c0_145 = arith.constant 0 : index
    %337 = vector.load %arg13[%c0_144, %c0_145] : memref<1x32xf32, #tpu.memory_space<vmem>>, vector<1x32xf32>
    %c0_146 = arith.constant 0 : index
    %c0_147 = arith.constant 0 : index
    %338 = vector.load %arg14[%c0_146, %c0_147] : memref<1x32xf32, #tpu.memory_space<vmem>>, vector<1x32xf32>
    %cst_148 = arith.constant dense<0.000000e+00> : vector<8xf32>
    %339 = vector.multi_reduction <add>, %336, %cst_148 [1] : vector<8x32xf32> to vector<8xf32>
    %340 = vector.shape_cast %339 : vector<8xf32> to vector<8x1xf32>
    %cst_149 = arith.constant 3.200000e+01 : f32
    %341 = vector.broadcast %cst_149 : f32 to vector<8x1xf32>
    %342 = arith.divf %340, %341 : vector<8x1xf32>
    %343 = vector.broadcast %342 : vector<8x1xf32> to vector<8x32xf32>
    %344 = arith.subf %336, %343 : vector<8x32xf32>
    %345 = arith.mulf %344, %344 : vector<8x32xf32>
    %cst_150 = arith.constant dense<0.000000e+00> : vector<8xf32>
    %346 = vector.multi_reduction <add>, %345, %cst_150 [1] : vector<8x32xf32> to vector<8xf32>
    %347 = vector.shape_cast %346 : vector<8xf32> to vector<8x1xf32>
    %cst_151 = arith.constant 3.200000e+01 : f32
    %348 = vector.broadcast %cst_151 : f32 to vector<8x1xf32>
    %349 = arith.divf %347, %348 : vector<8x1xf32>
    %350 = vector.broadcast %342 : vector<8x1xf32> to vector<8x32xf32>
    %351 = arith.subf %336, %350 : vector<8x32xf32>
    %cst_152 = arith.constant 9.99999974E-6 : f32
    %352 = vector.broadcast %cst_152 : f32 to vector<8x1xf32>
    %353 = arith.addf %349, %352 : vector<8x1xf32>
    %354 = math.rsqrt %353 : vector<8x1xf32>
    %355 = vector.broadcast %354 : vector<8x1xf32> to vector<8x32xf32>
    %356 = arith.mulf %351, %355 : vector<8x32xf32>
    %357 = vector.broadcast %337 : vector<1x32xf32> to vector<8x32xf32>
    %358 = arith.mulf %357, %356 : vector<8x32xf32>
    %359 = vector.broadcast %338 : vector<1x32xf32> to vector<8x32xf32>
    %360 = arith.addf %358, %359 : vector<8x32xf32>
    %c0_153 = arith.constant 0 : index
    %c0_154 = arith.constant 0 : index
    %361 = vector.load %arg15[%c0_153, %c0_154] : memref<32x256xf32, #tpu.memory_space<vmem>>, vector<32x256xf32>
    %cst_155 = arith.constant dense<0.000000e+00> : vector<8x256xf32>
    %362 = tpu.matmul %360, %361, %cst_155 {dimension_numbers = #tpu.dot_dimension_numbers<[1], [0], [0], [1], [0, 0, 1, 1], [], []>} : vector<8x32xf32>, vector<32x256xf32>, vector<8x256xf32> -> vector<8x256xf32>
    %c0_156 = arith.constant 0 : index
    %c0_157 = arith.constant 0 : index
    %c0_158 = arith.constant 0 : index
    %363 = vector.load %arg16[%c0_156, %c0_157, %c0_158] : memref<1x8x256xf32, #tpu.memory_space<vmem>>, vector<1x8x256xf32>
    %364 = vector.shape_cast %363 : vector<1x8x256xf32> to vector<8x256xf32>
    %365 = vector.shape_cast %362 : vector<8x256xf32> to vector<1x8x256xf32>
    tpu.vector_store %arg16[%c0_156, %c0_157, %c0_158], %365 {strides = array<i32>} : memref<1x8x256xf32, #tpu.memory_space<vmem>>, vector<1x8x256xf32>,
    return
  }
  func.func @transform_0(%arg0: i32) -> (i32, i32, i32) {
    %c0_i32 = arith.constant 0 : i32
    %c0_i32_0 = arith.constant 0 : i32
    %c0_i32_1 = arith.constant 0 : i32
    return %arg0, %c0_i32, %c0_i32_0 : i32, i32, i32
  }
  func.func @transform_1(%arg0: i32) -> (i32, i32, i32) {
    %c0_i32 = arith.constant 0 : i32
    %c0_i32_0 = arith.constant 0 : i32
    %c0_i32_1 = arith.constant 0 : i32
    %c0_i32_2 = arith.constant 0 : i32
    return %c0_i32, %c0_i32_0, %c0_i32_1 : i32, i32, i32
  }
  func.func @transform_2(%arg0: i32) -> (i32, i32, i32) {
    %c0_i32 = arith.constant 0 : i32
    %c0_i32_0 = arith.constant 0 : i32
    %c0_i32_1 = arith.constant 0 : i32
    %c0_i32_2 = arith.constant 0 : i32
    return %c0_i32, %c0_i32_0, %c0_i32_1 : i32, i32, i32
  }
  func.func @transform_3(%arg0: i32) -> (i32, i32, i32) {
    %c0_i32 = arith.constant 0 : i32
    %c0_i32_0 = arith.constant 0 : i32
    %c0_i32_1 = arith.constant 0 : i32
    %c0_i32_2 = arith.constant 0 : i32
    return %c0_i32, %c0_i32_0, %c0_i32_1 : i32, i32, i32
  }
  func.func @transform_4(%arg0: i32) -> (i32, i32, i32) {
    %c0_i32 = arith.constant 0 : i32
    %c0_i32_0 = arith.constant 0 : i32
    %c0_i32_1 = arith.constant 0 : i32
    %c0_i32_2 = arith.constant 0 : i32
    return %c0_i32, %c0_i32_0, %c0_i32_1 : i32, i32, i32
  }
  func.func @transform_5(%arg0: i32) -> (i32, i32, i32) {
    %c0_i32 = arith.constant 0 : i32
    %c0_i32_0 = arith.constant 0 : i32
    %c0_i32_1 = arith.constant 0 : i32
    %c0_i32_2 = arith.constant 0 : i32
    return %c0_i32, %c0_i32_0, %c0_i32_1 : i32, i32, i32
  }
  func.func @transform_6(%arg0: i32) -> (i32, i32, i32) {
    %c0_i32 = arith.constant 0 : i32
    %c0_i32_0 = arith.constant 0 : i32
    %c0_i32_1 = arith.constant 0 : i32
    %c0_i32_2 = arith.constant 0 : i32
    return %c0_i32, %c0_i32_0, %c0_i32_1 : i32, i32, i32
  }
  func.func @transform_7(%arg0: i32) -> (i32, i32, i32) {
    %c0_i32 = arith.constant 0 : i32
    %c0_i32_0 = arith.constant 0 : i32
    %c0_i32_1 = arith.constant 0 : i32
    %c0_i32_2 = arith.constant 0 : i32
    return %c0_i32, %c0_i32_0, %c0_i32_1 : i32, i32, i32
  }
  func.func @transform_8(%arg0: i32) -> (i32, i32, i32) {
    %c0_i32 = arith.constant 0 : i32
    %c0_i32_0 = arith.constant 0 : i32
    %c0_i32_1 = arith.constant 0 : i32
    %c0_i32_2 = arith.constant 0 : i32
    return %c0_i32, %c0_i32_0, %c0_i32_1 : i32, i32, i32
  }
  func.func @transform_9(%arg0: i32) -> (i32, i32, i32) {
    %c0_i32 = arith.constant 0 : i32
    %c0_i32_0 = arith.constant 0 : i32
    %c0_i32_1 = arith.constant 0 : i32
    %c0_i32_2 = arith.constant 0 : i32
    return %c0_i32, %c0_i32_0, %c0_i32_1 : i32, i32, i32
  }
  func.func @transform_10(%arg0: i32) -> (i32, i32, i32) {
    %c0_i32 = arith.constant 0 : i32
    %c0_i32_0 = arith.constant 0 : i32
    %c0_i32_1 = arith.constant 0 : i32
    %c0_i32_2 = arith.constant 0 : i32
    return %c0_i32, %c0_i32_0, %c0_i32_1 : i32, i32, i32
  }
  func.func @transform_11(%arg0: i32) -> (i32, i32, i32) {
    %c0_i32 = arith.constant 0 : i32
    %c0_i32_0 = arith.constant 0 : i32
    %c0_i32_1 = arith.constant 0 : i32
    %c0_i32_2 = arith.constant 0 : i32
    return %c0_i32, %c0_i32_0, %c0_i32_1 : i32, i32, i32
  }
  func.func @transform_12(%arg0: i32) -> (i32, i32) {
    %c0_i32 = arith.constant 0 : i32
    %c0_i32_0 = arith.constant 0 : i32
    %c0_i32_1 = arith.constant 0 : i32
    return %c0_i32, %c0_i32_0 : i32, i32
  }
  func.func @transform_13(%arg0: i32) -> (i32, i32) {
    %c0_i32 = arith.constant 0 : i32
    %c0_i32_0 = arith.constant 0 : i32
    %c0_i32_1 = arith.constant 0 : i32
    return %c0_i32, %c0_i32_0 : i32, i32
  }
  func.func @transform_14(%arg0: i32) -> (i32, i32) {
    %c0_i32 = arith.constant 0 : i32
    %c0_i32_0 = arith.constant 0 : i32
    %c0_i32_1 = arith.constant 0 : i32
    return %c0_i32, %c0_i32_0 : i32, i32
  }
  func.func @transform_15(%arg0: i32) -> (i32, i32, i32) {
    %c0_i32 = arith.constant 0 : i32
    %c0_i32_0 = arith.constant 0 : i32
    %c0_i32_1 = arith.constant 0 : i32
    return %arg0, %c0_i32, %c0_i32_0 : i32, i32, i32
  }
}

</mosaic_0001>

<llo_original>
// kernel: tpu_custom_call.1
$region0: #{tpu_custom_call.1}
  #allocation0 [shape = 'u32[]', space=smem, size = 0x4, offset = 0x4, fixed_abs, tag = 'smem constant byte address 0x4 - core index']
  #allocation1 [shape = 'u32[72,128]{1,0:T(1,128)}', space=vmem, size = 0x9000, scoped, tag = 'internal scratch']
  %s0 = inlined_call_operand.vmem [shape: f32[2,8,32], index: 0, kind: input, shape index: {}]
  %s1 = inlined_call_operand.vmem [shape: f32[2,1,32], index: 1, kind: input, shape index: {}]
  %s2 = inlined_call_operand.vmem [shape: f32[2,1,32], index: 2, kind: input, shape index: {}]
  %s3 = inlined_call_operand.vmem [shape: f32[2,32,96], index: 3, kind: input, shape index: {}]
  %s4 = inlined_call_operand.vmem [shape: f32[2,32,32], index: 4, kind: input, shape index: {}]
  %s5 = inlined_call_operand.vmem [shape: f32[2,1,32], index: 5, kind: input, shape index: {}]
  %s6 = inlined_call_operand.vmem [shape: f32[2,1,32], index: 6, kind: input, shape index: {}]
  %s7 = inlined_call_operand.vmem [shape: f32[2,1,32], index: 7, kind: input, shape index: {}]
  %s8 = inlined_call_operand.vmem [shape: f32[2,32,128], index: 8, kind: input, shape index: {}]
  %s9 = inlined_call_operand.vmem [shape: f32[2,1,128], index: 9, kind: input, shape index: {}]
  %s10 = inlined_call_operand.vmem [shape: f32[2,128,32], index: 10, kind: input, shape index: {}]
  %s11 = inlined_call_operand.vmem [shape: f32[2,1,32], index: 11, kind: input, shape index: {}]
  %s12 = inlined_call_operand.vmem [shape: f32[1,32], index: 12, kind: input, shape index: {}]
  %s13 = inlined_call_operand.vmem [shape: f32[1,32], index: 13, kind: input, shape index: {}]
  %s14 = inlined_call_operand.vmem [shape: f32[32,256], index: 14, kind: input, shape index: {}]
  %s15 = inlined_call_operand.hbm [shape: f32[2,8,256], index: 15, kind: output, shape index: {}]
  %s16 = sld [smem:[#allocation0]]
  $region93: #{tpu_custom_call.1} parent=0
    _
  %s18 = ssub.s32 1, %s16
  %s19 = scalar_select 0, %s18, %s16
  $region1: #{tpu_custom_call.1} parent=0
    #allocation2 [shape = 'u8[16384]{0}', space=vmem, size = 0x4000, scoped, tag = 'output window, operand 0']
    #allocation3 [shape = 's32[2]{0}', space=sflag, size = 0x8, scoped, tag = 'scoped memory for tpu_custom_call.1']
    %20 = vsyncpa [#allocation3], 0
    %s21 = scalar_lea.sflag [#allocation3], 1
    %22 = vsyncpa %s21, 0
    loop: start=0, step=1, limit=4
    $region2: #{tpu_custom_call.1} parent=1 // loop_pre_header
      _
    $region3: #{tpu_custom_call.1} parent=1 // loop_header
      %s24 = sphi 0, %s28
      %p25 = scmp.ge.s32.totalorder %s24, 4
      %s34 = sphi 0, %s36
      %s37 = sphi 0, %s34
      %s38 = sphi 0, %s37
      %s54 = sphi 0, %s38
      %s58 = sphi 0, %s58
      %s60 = sphi 0, %s58
      %s61 = sphi 0, %s60
      %s75 = sphi 0, %s61
      %s79 = sphi 0, %s79
      %s81 = sphi 0, %s79
      %s82 = sphi 0, %s81
      %s96 = sphi 0, %s82
      %s100 = sphi 0, %s100
      %s102 = sphi 0, %s100
      %s103 = sphi 0, %s102
      %s117 = sphi 0, %s103
      %s121 = sphi 0, %s121
      %s123 = sphi 0, %s121
      %s124 = sphi 0, %s123
      %s138 = sphi 0, %s124
      %s142 = sphi 0, %s142
      %s144 = sphi 0, %s142
      %s145 = sphi 0, %s144
      %s159 = sphi 0, %s145
      %s163 = sphi 0, %s163
      %s165 = sphi 0, %s163
      %s166 = sphi 0, %s165
      %s180 = sphi 0, %s166
      %s184 = sphi 0, %s184
      %s186 = sphi 0, %s184
      %s187 = sphi 0, %s186
      %s201 = sphi 0, %s187
      %s205 = sphi 0, %s205
      %s207 = sphi 0, %s205
      %s208 = sphi 0, %s207
      %s222 = sphi 0, %s208
      %s226 = sphi 0, %s226
      %s228 = sphi 0, %s226
      %s229 = sphi 0, %s228
      %s243 = sphi 0, %s229
      %s247 = sphi 0, %s247
      %s249 = sphi 0, %s247
      %s250 = sphi 0, %s249
      %s264 = sphi 0, %s250
      %s268 = sphi 0, %s268
      %s270 = sphi 0, %s268
      %s271 = sphi 0, %s270
      %s285 = sphi 0, %s271
      %s289 = sphi 0, %s289
      %s291 = sphi 0, %s289
      %s292 = sphi 0, %s291
      %s306 = sphi 0, %s292
      %s310 = sphi 0, %s310
      %s312 = sphi 0, %s310
      %s313 = sphi 0, %s312
      %s327 = sphi 0, %s313
      %s331 = sphi 0, %s331
      %s333 = sphi 0, %s331
      %s334 = sphi 0, %s333
      %s348 = sphi 0, %s334
      %s354 = sphi 0, %s356
      %s357 = sphi 0, %s354
      %s358 = sphi 0, %s357
      %s374 = sphi 0, %s358
    $region4: #{tpu_custom_call.1} parent=1 // loop_header_branch
      %27 = sbr.rel (%p25) target = $region8
    $region5: #{tpu_custom_call.1} parent=1 // loop_body
      %s29 = ssub.s32 %s24, 1
      %s30 = ssub.s32 %s24, 2
      %s31 = sadd.s32 %s24, 1
      %s32 = ssub.s32 %s24, %s31
      %p33 = scmp.eq.s32.totalorder %s32, 0
      %s35 = sadd.s32 %s34, 1
      %s36 = scalar_select %p33, %s34, %s35
      %p39 = pneg %p33
      %p40 = scmp.eq.s32.totalorder %s24, 1
      %p41 = por %p39, %p40
      %p42 = scmp.ne.s32.totalorder %s34, %s37
      %p43 = scmp.eq.s32.totalorder %s24, 0
      %p44 = por %p42, %p43
      %p45 = scmp.ne.s32.totalorder %s34, %s37
      %p46 = scmp.eq.s32.totalorder %s29, 1
      %p47 = por %p45, %p46
      %p48 = scmp.ne.s32.totalorder %s37, %s38
      %p49 = scmp.eq.s32.totalorder %s29, 0
      %p50 = por %p48, %p49
      %p51 = scmp.ne.s32.totalorder %s37, %s38
      %p52 = scmp.eq.s32.totalorder %s30, 1
      %p53 = por %p51, %p52
      %p55 = scmp.ne.s32.totalorder %s38, %s54
      %p56 = scmp.eq.s32.totalorder %s30, 0
      %p57 = por %p55, %p56
      %s59 = sadd.s32 %s58, 1
      %p62 = scmp.eq.s32.totalorder %s24, 1
      %p63 = scmp.ne.s32.totalorder %s58, %s60
      %p64 = scmp.eq.s32.totalorder %s24, 0
      %p65 = por %p63, %p64
      %p66 = scmp.ne.s32.totalorder %s58, %s60
      %p67 = scmp.eq.s32.totalorder %s29, 1
      %p68 = por %p66, %p67
      %p69 = scmp.ne.s32.totalorder %s60, %s61
      %p70 = scmp.eq.s32.totalorder %s29, 0
      %p71 = por %p69, %p70
      %p72 = scmp.ne.s32.totalorder %s60, %s61
      %p73 = scmp.eq.s32.totalorder %s30, 1
      %p74 = por %p72, %p73
      %p76 = scmp.ne.s32.totalorder %s61, %s75
      %p77 = scmp.eq.s32.totalorder %s30, 0
      %p78 = por %p76, %p77
      %s80 = sadd.s32 %s79, 1
      %p83 = scmp.eq.s32.totalorder %s24, 1
      %p84 = scmp.ne.s32.totalorder %s79, %s81
      %p85 = scmp.eq.s32.totalorder %s24, 0
      %p86 = por %p84, %p85
      %p87 = scmp.ne.s32.totalorder %s79, %s81
      %p88 = scmp.eq.s32.totalorder %s29, 1
      %p89 = por %p87, %p88
      %p90 = scmp.ne.s32.totalorder %s81, %s82
      %p91 = scmp.eq.s32.totalorder %s29, 0
      %p92 = por %p90, %p91
      %p93 = scmp.ne.s32.totalorder %s81, %s82
      %p94 = scmp.eq.s32.totalorder %s30, 1
      %p95 = por %p93, %p94
      %p97 = scmp.ne.s32.totalorder %s82, %s96
      %p98 = scmp.eq.s32.totalorder %s30, 0
      %p99 = por %p97, %p98
      %s101 = sadd.s32 %s100, 1
      %p104 = scmp.eq.s32.totalorder %s24, 1
      %p105 = scmp.ne.s32.totalorder %s100, %s102
      %p106 = scmp.eq.s32.totalorder %s24, 0
      %p107 = por %p105, %p106
      %p108 = scmp.ne.s32.totalorder %s100, %s102
      %p109 = scmp.eq.s32.totalorder %s29, 1
      %p110 = por %p108, %p109
      %p111 = scmp.ne.s32.totalorder %s102, %s103
      %p112 = scmp.eq.s32.totalorder %s29, 0
      %p113 = por %p111, %p112
      %p114 = scmp.ne.s32.totalorder %s102, %s103
      %p115 = scmp.eq.s32.totalorder %s30, 1
      %p116 = por %p114, %p115
      %p118 = scmp.ne.s32.totalorder %s103, %s117
      %p119 = scmp.eq.s32.totalorder %s30, 0
      %p120 = por %p118, %p119
      %s122 = sadd.s32 %s121, 1
      %p125 = scmp.eq.s32.totalorder %s24, 1
      %p126 = scmp.ne.s32.totalorder %s121, %s123
      %p127 = scmp.eq.s32.totalorder %s24, 0
      %p128 = por %p126, %p127
      %p129 = scmp.ne.s32.totalorder %s121, %s123
      %p130 = scmp.eq.s32.totalorder %s29, 1
      %p131 = por %p129, %p130
      %p132 = scmp.ne.s32.totalorder %s123, %s124
      %p133 = scmp.eq.s32.totalorder %s29, 0
      %p134 = por %p132, %p133
      %p135 = scmp.ne.s32.totalorder %s123, %s124
      %p136 = scmp.eq.s32.totalorder %s30, 1
      %p137 = por %p135, %p136
      %p139 = scmp.ne.s32.totalorder %s124, %s138
      %p140 = scmp.eq.s32.totalorder %s30, 0
      %p141 = por %p139, %p140
      %s143 = sadd.s32 %s142, 1
      %p146 = scmp.eq.s32.totalorder %s24, 1
      %p147 = scmp.ne.s32.totalorder %s142, %s144
      %p148 = scmp.eq.s32.totalorder %s24, 0
      %p149 = por %p147, %p148
      %p150 = scmp.ne.s32.totalorder %s142, %s144
      %p151 = scmp.eq.s32.totalorder %s29, 1
      %p152 = por %p150, %p151
      %p153 = scmp.ne.s32.totalorder %s144, %s145
      %p154 = scmp.eq.s32.totalorder %s29, 0
      %p155 = por %p153, %p154
      %p156 = scmp.ne.s32.totalorder %s144, %s145
      %p157 = scmp.eq.s32.totalorder %s30, 1
      %p158 = por %p156, %p157
      %p160 = scmp.ne.s32.totalorder %s145, %s159
      %p161 = scmp.eq.s32.totalorder %s30, 0
      %p162 = por %p160, %p161
      %s164 = sadd.s32 %s163, 1
      %p167 = scmp.eq.s32.totalorder %s24, 1
      %p168 = scmp.ne.s32.totalorder %s163, %s165
      %p169 = scmp.eq.s32.totalorder %s24, 0
      %p170 = por %p168, %p169
      %p171 = scmp.ne.s32.totalorder %s163, %s165
      %p172 = scmp.eq.s32.totalorder %s29, 1
      %p173 = por %p171, %p172
      %p174 = scmp.ne.s32.totalorder %s165, %s166
      %p175 = scmp.eq.s32.totalorder %s29, 0
      %p176 = por %p174, %p175
      %p177 = scmp.ne.s32.totalorder %s165, %s166
      %p178 = scmp.eq.s32.totalorder %s30, 1
      %p179 = por %p177, %p178
      %p181 = scmp.ne.s32.totalorder %s166, %s180
      %p182 = scmp.eq.s32.totalorder %s30, 0
      %p183 = por %p181, %p182
      %s185 = sadd.s32 %s184, 1
      %p188 = scmp.eq.s32.totalorder %s24, 1
      %p189 = scmp.ne.s32.totalorder %s184, %s186
      %p190 = scmp.eq.s32.totalorder %s24, 0
      %p191 = por %p189, %p190
      %p192 = scmp.ne.s32.totalorder %s184, %s186
      %p193 = scmp.eq.s32.totalorder %s29, 1
      %p194 = por %p192, %p193
      %p195 = scmp.ne.s32.totalorder %s186, %s187
      %p196 = scmp.eq.s32.totalorder %s29, 0
      %p197 = por %p195, %p196
      %p198 = scmp.ne.s32.totalorder %s186, %s187
      %p199 = scmp.eq.s32.totalorder %s30, 1
      %p200 = por %p198, %p199
      %p202 = scmp.ne.s32.totalorder %s187, %s201
      %p203 = scmp.eq.s32.totalorder %s30, 0
      %p204 = por %p202, %p203
      %s206 = sadd.s32 %s205, 1
      %p209 = scmp.eq.s32.totalorder %s24, 1
      %p210 = scmp.ne.s32.totalorder %s205, %s207
      %p211 = scmp.eq.s32.totalorder %s24, 0
      %p212 = por %p210, %p211
      %p213 = scmp.ne.s32.totalorder %s205, %s207
      %p214 = scmp.eq.s32.totalorder %s29, 1
      %p215 = por %p213, %p214
      %p216 = scmp.ne.s32.totalorder %s207, %s208
      %p217 = scmp.eq.s32.totalorder %s29, 0
      %p218 = por %p216, %p217
      %p219 = scmp.ne.s32.totalorder %s207, %s208
      %p220 = scmp.eq.s32.totalorder %s30, 1
      %p221 = por %p219, %p220
      %p223 = scmp.ne.s32.totalorder %s208, %s222
      %p224 = scmp.eq.s32.totalorder %s30, 0
      %p225 = por %p223, %p224
      %s227 = sadd.s32 %s226, 1
      %p230 = scmp.eq.s32.totalorder %s24, 1
      %p231 = scmp.ne.s32.totalorder %s226, %s228
      %p232 = scmp.eq.s32.totalorder %s24, 0
      %p233 = por %p231, %p232
      %p234 = scmp.ne.s32.totalorder %s226, %s228
      %p235 = scmp.eq.s32.totalorder %s29, 1
      %p236 = por %p234, %p235
      %p237 = scmp.ne.s32.totalorder %s228, %s229
      %p238 = scmp.eq.s32.totalorder %s29, 0
      %p239 = por %p237, %p238
      %p240 = scmp.ne.s32.totalorder %s228, %s229
      %p241 = scmp.eq.s32.totalorder %s30, 1
      %p242 = por %p240, %p241
      %p244 = scmp.ne.s32.totalorder %s229, %s243
      %p245 = scmp.eq.s32.totalorder %s30, 0
      %p246 = por %p244, %p245
      %s248 = sadd.s32 %s247, 1
      %p251 = scmp.eq.s32.totalorder %s24, 1
      %p252 = scmp.ne.s32.totalorder %s247, %s249
      %p253 = scmp.eq.s32.totalorder %s24, 0
      %p254 = por %p252, %p253
      %p255 = scmp.ne.s32.totalorder %s247, %s249
      %p256 = scmp.eq.s32.totalorder %s29, 1
      %p257 = por %p255, %p256
      %p258 = scmp.ne.s32.totalorder %s249, %s250
      %p259 = scmp.eq.s32.totalorder %s29, 0
      %p260 = por %p258, %p259
      %p261 = scmp.ne.s32.totalorder %s249, %s250
      %p262 = scmp.eq.s32.totalorder %s30, 1
      %p263 = por %p261, %p262
      %p265 = scmp.ne.s32.totalorder %s250, %s264
      %p266 = scmp.eq.s32.totalorder %s30, 0
      %p267 = por %p265, %p266
      %s269 = sadd.s32 %s268, 1
      %p272 = scmp.eq.s32.totalorder %s24, 1
      %p273 = scmp.ne.s32.totalorder %s268, %s270
      %p274 = scmp.eq.s32.totalorder %s24, 0
      %p275 = por %p273, %p274
      %p276 = scmp.ne.s32.totalorder %s268, %s270
      %p277 = scmp.eq.s32.totalorder %s29, 1
      %p278 = por %p276, %p277
      %p279 = scmp.ne.s32.totalorder %s270, %s271
      %p280 = scmp.eq.s32.totalorder %s29, 0
      %p281 = por %p279, %p280
      %p282 = scmp.ne.s32.totalorder %s270, %s271
      %p283 = scmp.eq.s32.totalorder %s30, 1
      %p284 = por %p282, %p283
      %p286 = scmp.ne.s32.totalorder %s271, %s285
      %p287 = scmp.eq.s32.totalorder %s30, 0
      %p288 = por %p286, %p287
      %s290 = sadd.s32 %s289, 1
      %p293 = scmp.eq.s32.totalorder %s24, 1
      %p294 = scmp.ne.s32.totalorder %s289, %s291
      %p295 = scmp.eq.s32.totalorder %s24, 0
      %p296 = por %p294, %p295
      %p297 = scmp.ne.s32.totalorder %s289, %s291
      %p298 = scmp.eq.s32.totalorder %s29, 1
      %p299 = por %p297, %p298
      %p300 = scmp.ne.s32.totalorder %s291, %s292
      %p301 = scmp.eq.s32.totalorder %s29, 0
      %p302 = por %p300, %p301
      %p303 = scmp.ne.s32.totalorder %s291, %s292
      %p304 = scmp.eq.s32.totalorder %s30, 1
      %p305 = por %p303, %p304
      %p307 = scmp.ne.s32.totalorder %s292, %s306
      %p308 = scmp.eq.s32.totalorder %s30, 0
      %p309 = por %p307, %p308
      %s311 = sadd.s32 %s310, 1
      %p314 = scmp.eq.s32.totalorder %s24, 1
      %p315 = scmp.ne.s32.totalorder %s310, %s312
      %p316 = scmp.eq.s32.totalorder %s24, 0
      %p317 = por %p315, %p316
      %p318 = scmp.ne.s32.totalorder %s310, %s312
      %p319 = scmp.eq.s32.totalorder %s29, 1
      %p320 = por %p318, %p319
      %p321 = scmp.ne.s32.totalorder %s312, %s313
      %p322 = scmp.eq.s32.totalorder %s29, 0
      %p323 = por %p321, %p322
      %p324 = scmp.ne.s32.totalorder %s312, %s313
      %p325 = scmp.eq.s32.totalorder %s30, 1
      %p326 = por %p324, %p325
      %p328 = scmp.ne.s32.totalorder %s313, %s327
      %p329 = scmp.eq.s32.totalorder %s30, 0
      %p330 = por %p328, %p329
      %s332 = sadd.s32 %s331, 1
      %p335 = scmp.eq.s32.totalorder %s24, 1
      %p336 = scmp.ne.s32.totalorder %s331, %s333
      %p337 = scmp.eq.s32.totalorder %s24, 0
      %p338 = por %p336, %p337
      %p339 = scmp.ne.s32.totalorder %s331, %s333
      %p340 = scmp.eq.s32.totalorder %s29, 1
      %p341 = por %p339, %p340
      %p342 = scmp.ne.s32.totalorder %s333, %s334
      %p343 = scmp.eq.s32.totalorder %s29, 0
      %p344 = por %p342, %p343
      %p345 = scmp.ne.s32.totalorder %s333, %s334
      %p346 = scmp.eq.s32.totalorder %s30, 1
      %p347 = por %p345, %p346
      %p349 = scmp.ne.s32.totalorder %s334, %s348
      %p350 = scmp.eq.s32.totalorder %s30, 0
      %p351 = por %p349, %p350
      %s352 = ssub.s32 %s24, %s31
      %p353 = scmp.eq.s32.totalorder %s352, 0
      %s355 = sadd.s32 %s354, 1
      %s356 = scalar_select %p353, %s354, %s355
      %p359 = pneg %p353
      %p360 = scmp.eq.s32.totalorder %s24, 1
      %p361 = por %p359, %p360
      %p362 = scmp.ne.s32.totalorder %s354, %s357
      %p363 = scmp.eq.s32.totalorder %s24, 0
      %p364 = por %p362, %p363
      %p365 = scmp.ne.s32.totalorder %s354, %s357
      %p366 = scmp.eq.s32.totalorder %s29, 1
      %p367 = por %p365, %p366
      %p368 = scmp.ne.s32.totalorder %s357, %s358
      %p369 = scmp.eq.s32.totalorder %s29, 0
      %p370 = por %p368, %p369
      %p371 = scmp.ne.s32.totalorder %s357, %s358
      %p372 = scmp.eq.s32.totalorder %s30, 1
      %p373 = por %p371, %p372
      %p375 = scmp.ne.s32.totalorder %s358, %s374
      %p376 = scmp.eq.s32.totalorder %s30, 0
      %p377 = por %p375, %p376
      %p378 = scmp.le.s32.totalorder 1, %s24
      %p379 = scmp.lt.s32.totalorder %s24, 3
      %p380 = pnand %p378, %p379
      %p381 = pneg %p380
      // Predicated region
      $region9: #{tpu_custom_call.1} parent=5 // pred_check
        _
      $region10: #{tpu_custom_call.1} parent=5 // pred_check_branch
        %383 = sbr.rel (%p380) target = $region12
      $region11: #{tpu_custom_call.1} parent=5 // pred_region
        %s384 = ssub.s32 %s24, 1
        // Predicated region
        $region13: #{tpu_custom_call.1} parent=11 // pred_check
          %p385 = pneg %p71
        $region14: #{tpu_custom_call.1} parent=11 // pred_check_branch
          %387 = sbr.rel (%p385) target = $region16
        $region15: #{tpu_custom_call.1} parent=11 // pred_region
          _
        $region16: #{tpu_custom_call.1} parent=11 // pred_fallthru
          _
        // Predicated region
        $region17: #{tpu_custom_call.1} parent=11 // pred_check
          %p388 = pneg %p92
        $region18: #{tpu_custom_call.1} parent=11 // pred_check_branch
          %390 = sbr.rel (%p388) target = $region20
        $region19: #{tpu_custom_call.1} parent=11 // pred_region
          _
        $region20: #{tpu_custom_call.1} parent=11 // pred_fallthru
          _
        // Predicated region
        $region21: #{tpu_custom_call.1} parent=11 // pred_check
          %p391 = pneg %p113
        $region22: #{tpu_custom_call.1} parent=11 // pred_check_branch
          %393 = sbr.rel (%p391) target = $region24
        $region23: #{tpu_custom_call.1} parent=11 // pred_region
          _
        $region24: #{tpu_custom_call.1} parent=11 // pred_fallthru
          _
        // Predicated region
        $region25: #{tpu_custom_call.1} parent=11 // pred_check
          %p394 = pneg %p134
        $region26: #{tpu_custom_call.1} parent=11 // pred_check_branch
          %396 = sbr.rel (%p394) target = $region28
        $region27: #{tpu_custom_call.1} parent=11 // pred_region
          _
        $region28: #{tpu_custom_call.1} parent=11 // pred_fallthru
          _
        // Predicated region
        $region29: #{tpu_custom_call.1} parent=11 // pred_check
          %p397 = pneg %p155
        $region30: #{tpu_custom_call.1} parent=11 // pred_check_branch
          %399 = sbr.rel (%p397) target = $region32
        $region31: #{tpu_custom_call.1} parent=11 // pred_region
          _
        $region32: #{tpu_custom_call.1} parent=11 // pred_fallthru
          _
        // Predicated region
        $region33: #{tpu_custom_call.1} parent=11 // pred_check
          %p400 = pneg %p176
        $region34: #{tpu_custom_call.1} parent=11 // pred_check_branch
          %402 = sbr.rel (%p400) target = $region36
        $region35: #{tpu_custom_call.1} parent=11 // pred_region
          _
        $region36: #{tpu_custom_call.1} parent=11 // pred_fallthru
          _
        // Predicated region
        $region37: #{tpu_custom_call.1} parent=11 // pred_check
          %p403 = pneg %p197
        $region38: #{tpu_custom_call.1} parent=11 // pred_check_branch
          %405 = sbr.rel (%p403) target = $region40
        $region39: #{tpu_custom_call.1} parent=11 // pred_region
          _
        $region40: #{tpu_custom_call.1} parent=11 // pred_fallthru
          _
        // Predicated region
        $region41: #{tpu_custom_call.1} parent=11 // pred_check
          %p406 = pneg %p218
        $region42: #{tpu_custom_call.1} parent=11 // pred_check_branch
          %408 = sbr.rel (%p406) target = $region44
        $region43: #{tpu_custom_call.1} parent=11 // pred_region
          _
        $region44: #{tpu_custom_call.1} parent=11 // pred_fallthru
          _
        // Predicated region
        $region45: #{tpu_custom_call.1} parent=11 // pred_check
          %p409 = pneg %p239
        $region46: #{tpu_custom_call.1} parent=11 // pred_check_branch
          %411 = sbr.rel (%p409) target = $region48
        $region47: #{tpu_custom_call.1} parent=11 // pred_region
          _
        $region48: #{tpu_custom_call.1} parent=11 // pred_fallthru
          _
        // Predicated region
        $region49: #{tpu_custom_call.1} parent=11 // pred_check
          %p412 = pneg %p260
        $region50: #{tpu_custom_call.1} parent=11 // pred_check_branch
          %414 = sbr.rel (%p412) target = $region52
        $region51: #{tpu_custom_call.1} parent=11 // pred_region
          _
        $region52: #{tpu_custom_call.1} parent=11 // pred_fallthru
          _
        // Predicated region
        $region53: #{tpu_custom_call.1} parent=11 // pred_check
          %p415 = pneg %p281
        $region54: #{tpu_custom_call.1} parent=11 // pred_check_branch
          %417 = sbr.rel (%p415) target = $region56
        $region55: #{tpu_custom_call.1} parent=11 // pred_region
          _
        $region56: #{tpu_custom_call.1} parent=11 // pred_fallthru
          _
        // Predicated region
        $region57: #{tpu_custom_call.1} parent=11 // pred_check
          %p418 = pneg %p302
        $region58: #{tpu_custom_call.1} parent=11 // pred_check_branch
          %420 = sbr.rel (%p418) target = $region60
        $region59: #{tpu_custom_call.1} parent=11 // pred_region
          _
        $region60: #{tpu_custom_call.1} parent=11 // pred_fallthru
          _
        // Predicated region
        $region61: #{tpu_custom_call.1} parent=11 // pred_check
          %p421 = pneg %p323
        $region62: #{tpu_custom_call.1} parent=11 // pred_check_branch
          %423 = sbr.rel (%p421) target = $region64
        $region63: #{tpu_custom_call.1} parent=11 // pred_region
          _
        $region64: #{tpu_custom_call.1} parent=11 // pred_fallthru
          _
        // Predicated region
        $region65: #{tpu_custom_call.1} parent=11 // pred_check
          %p424 = pneg %p344
        $region66: #{tpu_custom_call.1} parent=11 // pred_check_branch
          %426 = sbr.rel (%p424) target = $region68
        $region67: #{tpu_custom_call.1} parent=11 // pred_region
          _
        $region68: #{tpu_custom_call.1} parent=11 // pred_fallthru
          _
      $region12: #{tpu_custom_call.1} parent=5 // pred_fallthru
        _
      %p427 = scmp.lt.s32.totalorder %s24, 2
      // Predicated region
      $region69: #{tpu_custom_call.1} parent=5 // pred_check
        %p428 = pneg %p427
      $region70: #{tpu_custom_call.1} parent=5 // pred_check_branch
        %430 = sbr.rel (%p428) target = $region72
      $region71: #{tpu_custom_call.1} parent=5 // pred_region
        // Predicated region
        $region73: #{tpu_custom_call.1} parent=71 // pred_check
          %p431 = pneg %p44
        $region74: #{tpu_custom_call.1} parent=71 // pred_check_branch
          %433 = sbr.rel (%p431) target = $region76
        $region75: #{tpu_custom_call.1} parent=71 // pred_region
          %p434 = scmp.lt.s32.totalorder %s24, 1
          %s435 = scalar_select %p434, %s24, 1
          %s436 = smul.addr %s435, 8
          %s437 = scalar_lea.vmem %s0, %s436
        $region76: #{tpu_custom_call.1} parent=71 // pred_fallthru
          _
      $region72: #{tpu_custom_call.1} parent=5 // pred_fallthru
        _
      %p438 = scmp.le.s32.totalorder 1, %s24
      %p439 = scmp.lt.s32.totalorder %s24, 3
      %p440 = pnand %p438, %p439
      %p441 = pneg %p440
      // Predicated region
      $region77: #{tpu_custom_call.1} parent=5 // pred_check
        _
      $region78: #{tpu_custom_call.1} parent=5 // pred_check_branch
        %443 = sbr.rel (%p440) target = $region80
      $region79: #{tpu_custom_call.1} parent=5 // pred_region
        %s444 = ssub.s32 %s24, 1
        %p445 = scmp.lt.s32.totalorder %s29, 1
        %s446 = scalar_select %p445, %s29, 1
        %s447 = smul.addr %s446, 8
        %s448 = scalar_lea.vmem %s0, %s447
        %p449 = pneg %p50
        %p450 = pneg %p47
        %p451 = pneg %p71
        %p452 = pneg %p68
        %p453 = pneg %p92
        %p454 = pneg %p89
        %p455 = pneg %p113
        %p456 = pneg %p110
        %p457 = pneg %p134
        %p458 = pneg %p131
        %p459 = pneg %p155
        %p460 = pneg %p152
        %p461 = pneg %p176
        %p462 = pneg %p173
        %p463 = pneg %p197
        %p464 = pneg %p194
        %p465 = pneg %p218
        %p466 = pneg %p215
        %p467 = pneg %p239
        %p468 = pneg %p236
        %p469 = pneg %p260
        %p470 = pneg %p257
        %p471 = pneg %p281
        %p472 = pneg %p278
        %p473 = pneg %p302
        %p474 = pneg %p299
        %p475 = pneg %p323
        %p476 = pneg %p320
        %p477 = pneg %p344
        %p478 = pneg %p341
        %p479 = pneg %p370
        %p480 = pneg %p367
        %s481 = sand.u32 %s357, 1
        %s482 = scalar_lea.sflag [#allocation3], %s481
        %s483 = sand.u32 %s357, 1
        %s484 = smul.addr %s483, 16
        %s485 = scalar_lea.vmem [#allocation2], %s484
        %p486 = scmp.lt.s32.totalorder %s29, 1
        %s487 = scalar_select %p486, %s29, 1
        %s488 = smul.addr %s487, 8
        %s489 = scalar_lea.vmem %s0, %s488
        %v490 = vld [vmem:[%s489] sm:$0xff]
        %v491 = vlaneseq
        %v492 = vshrl.u32 %v491, 7
        %v493 = vlaneseq
        %v494 = vand.u32 %v493, 127
        %vm495 = vcmp.gt.s32.totalorder %v494, %v492
        %v496 = vld [vmem:[%s1] sm:$0x1]
        %v497 = vld [vmem:[%s2] sm:$0x1]
        %vm498 = vcmask 261120
        %v499 = vsel %vm498, %v490, 0.0
        %500 = vadd.xlane.f32.xlu0 %v499
        %v501 = vpop.xlane.xlu0 %500
        %v502 = vrcp.pop 32.0
        %v503 = vmul.f32 32.0, %v502
        %v504 = vsub.f32 1.0, %v503
        %v505 = vmul.f32 %v502, %v504
        %v506 = vadd.f32 %v502, %v505
        %vm507 = vweird.f32 %v502
        %v508 = vsel %vm507, %v502, %v506
        %v509 = vmul.f32 %v501, %v508
        %v510 = vsub.f32 %v490, %v509
        %v511 = vmul.f32 %v510, %v510
        %v512 = vsel %vm498, %v511, 0.0
        %513 = vadd.xlane.f32.xlu0 %v512
        %v514 = vpop.xlane.xlu0 %513
        %v515 = vmul.f32 %v514, %v508
        %v516 = vadd.f32 %v515, 1e-05
        %v517 = vrsqrt.pop %v516
        %v518 = vmul.f32 %v517, %v516
        %v519 = vmul.f32 %v518, %v517
        %v520 = vmul.f32 0.5, %v519
        %v521 = vsub.f32 1.5, %v520
        %v522 = vmul.f32 %v517, %v521
        %vm523 = vweird.f32 %v516
        %vm524 = vweird.f32 %v517
        %vm525 = vmor %vm523, %vm524
        %v526 = vsel %vm525, %v517, %v522
        %v527 = vmul.f32 %v510, %v526
        %v529 = vperm.slane %v496, 0
        %v531 = vmul.f32 %v529, %v527
        %v533 = vperm.slane %v497, 0
        %v535 = vadd.f32 %v531, %v533
        %v536 = vld [vmem:[%s3] sm:$0xff]
        %v537 = vld [vmem:[%s3 + $0x8] sm:$0xff]
        %v538 = vld [vmem:[%s3 + $0x10] sm:$0xff]
        %v539 = vld [vmem:[%s3 + $0x18] sm:$0xff]
        %v541 = vsel %vm498, %v535, 0
        %543 = vmatpush.msra.mxu0 0.0
        %544 = vmatpush.msra.mxu0 0.0
        %545 = vmatpush.msra.mxu0 0.0
        %546 = vmatpush.msra.mxu0 0.0
        %547 = vmatpush.msra.mxu0 0.0
        %548 = vmatpush.msra.mxu0 0.0
        %549 = vmatpush.msra.mxu0 0.0
        %550 = vmatpush.msra.mxu0 0.0
        %551 = vmatpush.msra.mxu0 0.0
        %552 = vmatpush.msra.mxu0 0.0
        %553 = vmatpush.msra.mxu0 0.0
        %554 = vmatpush.msra.mxu0 0.0
        %555 = vmatpush.msra.mxu0 %v539
        %556 = vmatpush.msra.mxu0 %v538
        %557 = vmatpush.msra.mxu0 %v537
        %558 = vmatpush.msra.mxu0 %v536
        %559 = vmatmul.f32.gmra.mxu0 %v541
        %v560 = vpop.f32.mrf.mxu0
        %v561 = vadd.f32 0.0, %v560
        %562 = vdwg.mxu0
        %v563 = vmul.f32 %v561, 0.35355338
        %565 = vrot.lane.b32.xlu0 %v561, 96
        %v566 = vpop.permute.xlu0 %565
        %vm567 = vcmask 64512
        %v569 = vsel %vm567, %v563, 0
        %v571 = vsel %vm567, %v566, 0
        %573 = vmatpush.xpose.msra.mxu0 0.0
        %574 = vmatpush.xpose.msra.mxu0 0.0
        %575 = vmatpush.xpose.msra.mxu0 0.0
        %576 = vmatpush.xpose.msra.mxu0 0.0
        %577 = vmatpush.xpose.msra.mxu0 0.0
        %578 = vmatpush.xpose.msra.mxu0 0.0
        %579 = vmatpush.xpose.msra.mxu0 0.0
        %580 = vmatpush.xpose.msra.mxu0 0.0
        %581 = vmatpush.xpose.msra.mxu0 0.0
        %582 = vmatpush.xpose.msra.mxu0 0.0
        %583 = vmatpush.xpose.msra.mxu0 0.0
        %584 = vmatpush.xpose.msra.mxu0 0.0
        %585 = vmatpush.xpose.msra.mxu0 0.0
        %586 = vmatpush.xpose.msra.mxu0 0.0
        %587 = vmatpush.xpose.msra.mxu0 0.0
        %588 = vmatpush.xpose.msra.mxu0 %v571
        %589 = vmatmul.f32.gmra.mxu0 %v569
        %v590 = vpop.f32.mrf.mxu0
        %v591 = vadd.f32 0.0, %v590
        %592 = vdwg.mxu0
        %v593 = vsel %vm495, -inf, %v591
        %v594 = vsel %vm567, %v593, -inf
        %595 = vmax.xlane.f32.xlu0 %v594
        %v596 = vpop.xlane.xlu0 %595
        %v597 = vsub.f32 %v593, %v596
        %v598 = vmul.f32 %v597, 1.442695
        %v599 = vpow.pop %v598
        %v600 = vsel %vm567, %v599, 0.0
        %601 = vadd.xlane.f32.xlu0 %v600
        %v602 = vpop.xlane.xlu0 %601
        %v603 = vrcp.pop %v602
        %v604 = vmul.f32 %v599, %v603
        %605 = vrot.lane.b32.xlu0 %v561, 64
        %v606 = vpop.permute.xlu0 %605
        %v609 = vsel %vm567, %v604, 0
        %611 = vmatpush.msra.mxu0 0.0
        %612 = vmatpush.msra.mxu0 0.0
        %613 = vmatpush.msra.mxu0 0.0
        %614 = vmatpush.msra.mxu0 0.0
        %615 = vmatpush.msra.mxu0 0.0
        %616 = vmatpush.msra.mxu0 0.0
        %617 = vmatpush.msra.mxu0 0.0
        %618 = vmatpush.msra.mxu0 0.0
        %619 = vmatpush.msra.mxu0 0.0
        %620 = vmatpush.msra.mxu0 0.0
        %621 = vmatpush.msra.mxu0 0.0
        %622 = vmatpush.msra.mxu0 0.0
        %623 = vmatpush.msra.mxu0 0.0
        %624 = vmatpush.msra.mxu0 0.0
        %625 = vmatpush.msra.mxu0 0.0
        %626 = vmatpush.msra.mxu0 %v606
        %627 = vmatmul.f32.gmra.mxu0 %v609
        %v628 = vpop.f32.mrf.mxu0
        %v629 = vadd.f32 0.0, %v628
        %630 = vdwg.mxu0
        %631 = vrot.lane.b32.xlu0 %v563, 120
        %v632 = vpop.permute.xlu0 %631
        %633 = vrot.lane.b32.xlu0 %v561, 88
        %v634 = vpop.permute.xlu0 %633
        %v635 = vsel %vm567, %v632, 0
        %v637 = vsel %vm567, %v634, 0
        %639 = vmatpush.xpose.msra.mxu0 0.0
        %640 = vmatpush.xpose.msra.mxu0 0.0
        %641 = vmatpush.xpose.msra.mxu0 0.0
        %642 = vmatpush.xpose.msra.mxu0 0.0
        %643 = vmatpush.xpose.msra.mxu0 0.0
        %644 = vmatpush.xpose.msra.mxu0 0.0
        %645 = vmatpush.xpose.msra.mxu0 0.0
        %646 = vmatpush.xpose.msra.mxu0 0.0
        %647 = vmatpush.xpose.msra.mxu0 0.0
        %648 = vmatpush.xpose.msra.mxu0 0.0
        %649 = vmatpush.xpose.msra.mxu0 0.0
        %650 = vmatpush.xpose.msra.mxu0 0.0
        %651 = vmatpush.xpose.msra.mxu0 0.0
        %652 = vmatpush.xpose.msra.mxu0 0.0
        %653 = vmatpush.xpose.msra.mxu0 0.0
        %654 = vmatpush.xpose.msra.mxu0 %v637
        %655 = vmatmul.f32.gmra.mxu0 %v635
        %v656 = vpop.f32.mrf.mxu0
        %v657 = vadd.f32 0.0, %v656
        %658 = vdwg.mxu0
        %v659 = vsel %vm495, -inf, %v657
        %v660 = vsel %vm567, %v659, -inf
        %661 = vmax.xlane.f32.xlu0 %v660
        %v662 = vpop.xlane.xlu0 %661
        %v663 = vsub.f32 %v659, %v662
        %v664 = vmul.f32 %v663, 1.442695
        %v665 = vpow.pop %v664
        %v666 = vsel %vm567, %v665, 0.0
        %667 = vadd.xlane.f32.xlu0 %v666
        %v668 = vpop.xlane.xlu0 %667
        %v669 = vrcp.pop %v668
        %v670 = vmul.f32 %v665, %v669
        %671 = vrot.lane.b32.xlu0 %v561, 56
        %v672 = vpop.permute.xlu0 %671
        %v675 = vsel %vm567, %v670, 0
        %677 = vmatpush.msra.mxu0 0.0
        %678 = vmatpush.msra.mxu0 0.0
        %679 = vmatpush.msra.mxu0 0.0
        %680 = vmatpush.msra.mxu0 0.0
        %681 = vmatpush.msra.mxu0 0.0
        %682 = vmatpush.msra.mxu0 0.0
        %683 = vmatpush.msra.mxu0 0.0
        %684 = vmatpush.msra.mxu0 0.0
        %685 = vmatpush.msra.mxu0 0.0
        %686 = vmatpush.msra.mxu0 0.0
        %687 = vmatpush.msra.mxu0 0.0
        %688 = vmatpush.msra.mxu0 0.0
        %689 = vmatpush.msra.mxu0 0.0
        %690 = vmatpush.msra.mxu0 0.0
        %691 = vmatpush.msra.mxu0 0.0
        %692 = vmatpush.msra.mxu0 %v672
        %693 = vmatmul.f32.gmra.mxu0 %v675
        %v694 = vpop.f32.mrf.mxu0
        %v695 = vadd.f32 0.0, %v694
        %696 = vdwg.mxu0
        %697 = vrot.lane.b32.xlu0 %v563, 112
        %v698 = vpop.permute.xlu0 %697
        %699 = vrot.lane.b32.xlu0 %v561, 80
        %v700 = vpop.permute.xlu0 %699
        %v701 = vsel %vm567, %v698, 0
        %v703 = vsel %vm567, %v700, 0
        %705 = vmatpush.xpose.msra.mxu0 0.0
        %706 = vmatpush.xpose.msra.mxu0 0.0
        %707 = vmatpush.xpose.msra.mxu0 0.0
        %708 = vmatpush.xpose.msra.mxu0 0.0
        %709 = vmatpush.xpose.msra.mxu0 0.0
        %710 = vmatpush.xpose.msra.mxu0 0.0
        %711 = vmatpush.xpose.msra.mxu0 0.0
        %712 = vmatpush.xpose.msra.mxu0 0.0
        %713 = vmatpush.xpose.msra.mxu0 0.0
        %714 = vmatpush.xpose.msra.mxu0 0.0
        %715 = vmatpush.xpose.msra.mxu0 0.0
        %716 = vmatpush.xpose.msra.mxu0 0.0
        %717 = vmatpush.xpose.msra.mxu0 0.0
        %718 = vmatpush.xpose.msra.mxu0 0.0
        %719 = vmatpush.xpose.msra.mxu0 0.0
        %720 = vmatpush.xpose.msra.mxu0 %v703
        %721 = vmatmul.f32.gmra.mxu0 %v701
        %v722 = vpop.f32.mrf.mxu0
        %v723 = vadd.f32 0.0, %v722
        %724 = vdwg.mxu0
        %v725 = vsel %vm495, -inf, %v723
        %v726 = vsel %vm567, %v725, -inf
        %727 = vmax.xlane.f32.xlu0 %v726
        %v728 = vpop.xlane.xlu0 %727
        %v729 = vsub.f32 %v725, %v728
        %v730 = vmul.f32 %v729, 1.442695
        %v731 = vpow.pop %v730
        %v732 = vsel %vm567, %v731, 0.0
        %733 = vadd.xlane.f32.xlu0 %v732
        %v734 = vpop.xlane.xlu0 %733
        %v735 = vrcp.pop %v734
        %v736 = vmul.f32 %v731, %v735
        %737 = vrot.lane.b32.xlu0 %v561, 48
        %v738 = vpop.permute.xlu0 %737
        %v741 = vsel %vm567, %v736, 0
        %743 = vmatpush.msra.mxu0 0.0
        %744 = vmatpush.msra.mxu0 0.0
        %745 = vmatpush.msra.mxu0 0.0
        %746 = vmatpush.msra.mxu0 0.0
        %747 = vmatpush.msra.mxu0 0.0
        %748 = vmatpush.msra.mxu0 0.0
        %749 = vmatpush.msra.mxu0 0.0
        %750 = vmatpush.msra.mxu0 0.0
        %751 = vmatpush.msra.mxu0 0.0
        %752 = vmatpush.msra.mxu0 0.0
        %753 = vmatpush.msra.mxu0 0.0
        %754 = vmatpush.msra.mxu0 0.0
        %755 = vmatpush.msra.mxu0 0.0
        %756 = vmatpush.msra.mxu0 0.0
        %757 = vmatpush.msra.mxu0 0.0
        %758 = vmatpush.msra.mxu0 %v738
        %759 = vmatmul.f32.gmra.mxu0 %v741
        %v760 = vpop.f32.mrf.mxu0
        %v761 = vadd.f32 0.0, %v760
        %762 = vdwg.mxu0
        %763 = vrot.lane.b32.xlu0 %v563, 104
        %v764 = vpop.permute.xlu0 %763
        %765 = vrot.lane.b32.xlu0 %v561, 72
        %v766 = vpop.permute.xlu0 %765
        %v767 = vsel %vm567, %v764, 0
        %v769 = vsel %vm567, %v766, 0
        %771 = vmatpush.xpose.msra.mxu0 0.0
        %772 = vmatpush.xpose.msra.mxu0 0.0
        %773 = vmatpush.xpose.msra.mxu0 0.0
        %774 = vmatpush.xpose.msra.mxu0 0.0
        %775 = vmatpush.xpose.msra.mxu0 0.0
        %776 = vmatpush.xpose.msra.mxu0 0.0
        %777 = vmatpush.xpose.msra.mxu0 0.0
        %778 = vmatpush.xpose.msra.mxu0 0.0
        %779 = vmatpush.xpose.msra.mxu0 0.0
        %780 = vmatpush.xpose.msra.mxu0 0.0
        %781 = vmatpush.xpose.msra.mxu0 0.0
        %782 = vmatpush.xpose.msra.mxu0 0.0
        %783 = vmatpush.xpose.msra.mxu0 0.0
        %784 = vmatpush.xpose.msra.mxu0 0.0
        %785 = vmatpush.xpose.msra.mxu0 0.0
        %786 = vmatpush.xpose.msra.mxu0 %v769
        %787 = vmatmul.f32.gmra.mxu0 %v767
        %v788 = vpop.f32.mrf.mxu0
        %v789 = vadd.f32 0.0, %v788
        %790 = vdwg.mxu0
        %v791 = vsel %vm495, -inf, %v789
        %v792 = vsel %vm567, %v791, -inf
        %793 = vmax.xlane.f32.xlu0 %v792
        %v794 = vpop.xlane.xlu0 %793
        %v795 = vsub.f32 %v791, %v794
        %v796 = vmul.f32 %v795, 1.442695
        %v797 = vpow.pop %v796
        %v798 = vsel %vm567, %v797, 0.0
        %799 = vadd.xlane.f32.xlu0 %v798
        %v800 = vpop.xlane.xlu0 %799
        %v801 = vrcp.pop %v800
        %v802 = vmul.f32 %v797, %v801
        %803 = vrot.lane.b32.xlu0 %v561, 40
        %v804 = vpop.permute.xlu0 %803
        %v807 = vsel %vm567, %v802, 0
        %809 = vmatpush.msra.mxu0 0.0
        %810 = vmatpush.msra.mxu0 0.0
        %811 = vmatpush.msra.mxu0 0.0
        %812 = vmatpush.msra.mxu0 0.0
        %813 = vmatpush.msra.mxu0 0.0
        %814 = vmatpush.msra.mxu0 0.0
        %815 = vmatpush.msra.mxu0 0.0
        %816 = vmatpush.msra.mxu0 0.0
        %817 = vmatpush.msra.mxu0 0.0
        %818 = vmatpush.msra.mxu0 0.0
        %819 = vmatpush.msra.mxu0 0.0
        %820 = vmatpush.msra.mxu0 0.0
        %821 = vmatpush.msra.mxu0 0.0
        %822 = vmatpush.msra.mxu0 0.0
        %823 = vmatpush.msra.mxu0 0.0
        %824 = vmatpush.msra.mxu0 %v804
        %825 = vmatmul.f32.gmra.mxu0 %v807
        %v826 = vpop.f32.mrf.mxu0
        %v827 = vadd.f32 0.0, %v826
        %828 = vdwg.mxu0
        %830 = vrot.lane.b32.xlu0 %v695, 8
        %v831 = vpop.permute.xlu0 %830
        %834 = vrot.lane.b32.xlu0 %v761, 16
        %v835 = vpop.permute.xlu0 %834
        %838 = vrot.lane.b32.xlu0 %v827, 24
        %v839 = vpop.permute.xlu0 %838
        %v841 = vsel %vm567, %v629, %v831
        %vm842 = vcmask 130048
        %v843 = vsel %vm842, %v841, %v835
        %vm844 = vcmask 195584
        %v845 = vsel %vm844, %v843, %v839
        %v846 = vld [vmem:[%s4] sm:$0xff]
        %v847 = vld [vmem:[%s4 + $0x8] sm:$0xff]
        %v848 = vld [vmem:[%s4 + $0x10] sm:$0xff]
        %v849 = vld [vmem:[%s4 + $0x18] sm:$0xff]
        %v850 = vld [vmem:[%s5] sm:$0x1]
        %v852 = vperm.slane %v850, 0
        %v855 = vsel %vm498, %v845, 0
        %857 = vmatpush.msra.mxu0 0.0
        %858 = vmatpush.msra.mxu0 0.0
        %859 = vmatpush.msra.mxu0 0.0
        %860 = vmatpush.msra.mxu0 0.0
        %861 = vmatpush.msra.mxu0 0.0
        %862 = vmatpush.msra.mxu0 0.0
        %863 = vmatpush.msra.mxu0 0.0
        %864 = vmatpush.msra.mxu0 0.0
        %865 = vmatpush.msra.mxu0 0.0
        %866 = vmatpush.msra.mxu0 0.0
        %867 = vmatpush.msra.mxu0 0.0
        %868 = vmatpush.msra.mxu0 0.0
        %869 = vmatpush.msra.mxu0 %v849
        %870 = vmatpush.msra.mxu0 %v848
        %871 = vmatpush.msra.mxu0 %v847
        %872 = vmatpush.msra.mxu0 %v846
        %873 = vmatmul.f32.gmra.mxu0 %v855
        %v874 = vpop.f32.mrf.mxu0
        %v875 = vadd.f32 %v852, %v874
        %876 = vdwg.mxu0
        %v877 = vadd.f32 %v875, %v490
        %v878 = vld [vmem:[%s6] sm:$0x1]
        %v879 = vld [vmem:[%s7] sm:$0x1]
        %v880 = vsel %vm498, %v877, 0.0
        %881 = vadd.xlane.f32.xlu0 %v880
        %v882 = vpop.xlane.xlu0 %881
        %v883 = vmul.f32 %v882, %v508
        %v884 = vsub.f32 %v877, %v883
        %v885 = vmul.f32 %v884, %v884
        %v886 = vsel %vm498, %v885, 0.0
        %887 = vadd.xlane.f32.xlu0 %v886
        %v888 = vpop.xlane.xlu0 %887
        %v889 = vmul.f32 %v888, %v508
        %v890 = vadd.f32 %v889, 1e-05
        %v891 = vrsqrt.pop %v890
        %v892 = vmul.f32 %v891, %v890
        %v893 = vmul.f32 %v892, %v891
        %v894 = vmul.f32 0.5, %v893
        %v895 = vsub.f32 1.5, %v894
        %v896 = vmul.f32 %v891, %v895
        %vm897 = vweird.f32 %v890
        %vm898 = vweird.f32 %v891
        %vm899 = vmor %vm897, %vm898
        %v900 = vsel %vm899, %v891, %v896
        %v901 = vmul.f32 %v884, %v900
        %v903 = vperm.slane %v878, 0
        %v905 = vmul.f32 %v903, %v901
        %v907 = vperm.slane %v879, 0
        %v909 = vadd.f32 %v905, %v907
        %v910 = vld [vmem:[%s8] sm:$0xff]
        %v911 = vld [vmem:[%s8 + $0x8] sm:$0xff]
        %v912 = vld [vmem:[%s8 + $0x10] sm:$0xff]
        %v913 = vld [vmem:[%s8 + $0x18] sm:$0xff]
        %v914 = vld [vmem:[%s9] sm:$0x1]
        %v916 = vperm.slane %v914, 0
        %v919 = vsel %vm498, %v909, 0
        %921 = vmatpush.msra.mxu0 0.0
        %922 = vmatpush.msra.mxu0 0.0
        %923 = vmatpush.msra.mxu0 0.0
        %924 = vmatpush.msra.mxu0 0.0
        %925 = vmatpush.msra.mxu0 0.0
        %926 = vmatpush.msra.mxu0 0.0
        %927 = vmatpush.msra.mxu0 0.0
        %928 = vmatpush.msra.mxu0 0.0
        %929 = vmatpush.msra.mxu0 0.0
        %930 = vmatpush.msra.mxu0 0.0
        %931 = vmatpush.msra.mxu0 0.0
        %932 = vmatpush.msra.mxu0 0.0
        %933 = vmatpush.msra.mxu0 %v913
        %934 = vmatpush.msra.mxu0 %v912
        %935 = vmatpush.msra.mxu0 %v911
        %936 = vmatpush.msra.mxu0 %v910
        %937 = vmatmul.f32.gmra.mxu0 %v919
        %v938 = vpop.f32.mrf.mxu0
        %v939 = vadd.f32 %v916, %v938
        %940 = vdwg.mxu0
        %v941 = vmul.f32 %v939, 0.5
        %v942 = vmul.f32 %v939, %v939
        %v943 = vmul.f32 %v939, %v942
        %v944 = vmul.f32 %v943, 0.044715
        %v945 = vadd.f32 %v939, %v944
        %v946 = vmul.f32 %v945, 0.7978845
        %v947 = vtanh.pop %v946
        %v948 = vadd.f32 %v947, 1.0
        %v949 = vmul.f32 %v941, %v948
        %v950 = vld [vmem:[%s10] sm:$0xff]
        %v951 = vld [vmem:[%s10 + $0x8] sm:$0xff]
        %v952 = vld [vmem:[%s10 + $0x10] sm:$0xff]
        %v953 = vld [vmem:[%s10 + $0x18] sm:$0xff]
        %v954 = vld [vmem:[%s10 + $0x20] sm:$0xff]
        %v955 = vld [vmem:[%s10 + $0x28] sm:$0xff]
        %v956 = vld [vmem:[%s10 + $0x30] sm:$0xff]
        %v957 = vld [vmem:[%s10 + $0x38] sm:$0xff]
        %v958 = vld [vmem:[%s10 + $0x40] sm:$0xff]
        %v959 = vld [vmem:[%s10 + $0x48] sm:$0xff]
        %v960 = vld [vmem:[%s10 + $0x50] sm:$0xff]
        %v961 = vld [vmem:[%s10 + $0x58] sm:$0xff]
        %v962 = vld [vmem:[%s10 + $0x60] sm:$0xff]
        %v963 = vld [vmem:[%s10 + $0x68] sm:$0xff]
        %v964 = vld [vmem:[%s10 + $0x70] sm:$0xff]
        %v965 = vld [vmem:[%s10 + $0x78] sm:$0xff]
        %v966 = vld [vmem:[%s11] sm:$0x1]
        %v968 = vperm.slane %v966, 0
        %970 = vmatpush.msra.mxu0 %v965
        %971 = vmatpush.msra.mxu0 %v964
        %972 = vmatpush.msra.mxu0 %v963
        %973 = vmatpush.msra.mxu0 %v962
        %974 = vmatpush.msra.mxu0 %v961
        %975 = vmatpush.msra.mxu0 %v960
        %976 = vmatpush.msra.mxu0 %v959
        %977 = vmatpush.msra.mxu0 %v958
        %978 = vmatpush.msra.mxu0 %v957
        %979 = vmatpush.msra.mxu0 %v956
        %980 = vmatpush.msra.mxu0 %v955
        %981 = vmatpush.msra.mxu0 %v954
        %982 = vmatpush.msra.mxu0 %v953
        %983 = vmatpush.msra.mxu0 %v952
        %984 = vmatpush.msra.mxu0 %v951
        %985 = vmatpush.msra.mxu0 %v950
        %986 = vmatmul.f32.gmra.mxu0 %v949
        %v987 = vpop.f32.mrf.mxu0
        %v988 = vadd.f32 %v968, %v987
        %989 = vdwg.mxu0
        %v990 = vadd.f32 %v988, %v877
        %s991 = scalar_lea.vmem %s1, 1
        %v992 = vld [vmem:[%s991] sm:$0x1]
        %s993 = scalar_lea.vmem %s2, 1
        %v994 = vld [vmem:[%s993] sm:$0x1]
        %v995 = vsel %vm498, %v990, 0.0
        %996 = vadd.xlane.f32.xlu0 %v995
        %v997 = vpop.xlane.xlu0 %996
        %v998 = vmul.f32 %v997, %v508
        %v999 = vsub.f32 %v990, %v998
        %v1000 = vmul.f32 %v999, %v999
        %v1001 = vsel %vm498, %v1000, 0.0
        %1002 = vadd.xlane.f32.xlu0 %v1001
        %v1003 = vpop.xlane.xlu0 %1002
        %v1004 = vmul.f32 %v1003, %v508
        %v1005 = vadd.f32 %v1004, 1e-05
        %v1006 = vrsqrt.pop %v1005
        %v1007 = vmul.f32 %v1006, %v1005
        %v1008 = vmul.f32 %v1007, %v1006
        %v1009 = vmul.f32 0.5, %v1008
        %v1010 = vsub.f32 1.5, %v1009
        %v1011 = vmul.f32 %v1006, %v1010
        %vm1012 = vweird.f32 %v1005
        %vm1013 = vweird.f32 %v1006
        %vm1014 = vmor %vm1012, %vm1013
        %v1015 = vsel %vm1014, %v1006, %v1011
        %v1016 = vmul.f32 %v999, %v1015
        %v1018 = vperm.slane %v992, 0
        %v1020 = vmul.f32 %v1018, %v1016
        %v1022 = vperm.slane %v994, 0
        %v1024 = vadd.f32 %v1020, %v1022
        %s1025 = scalar_lea.vmem %s3, 32
        %v1026 = vld [vmem:[%s1025] sm:$0xff]
        %v1027 = vld [vmem:[%s1025 + $0x8] sm:$0xff]
        %v1028 = vld [vmem:[%s1025 + $0x10] sm:$0xff]
        %v1029 = vld [vmem:[%s1025 + $0x18] sm:$0xff]
        %v1031 = vsel %vm498, %v1024, 0
        %1033 = vmatpush.msra.mxu0 0.0
        %1034 = vmatpush.msra.mxu0 0.0
        %1035 = vmatpush.msra.mxu0 0.0
        %1036 = vmatpush.msra.mxu0 0.0
        %1037 = vmatpush.msra.mxu0 0.0
        %1038 = vmatpush.msra.mxu0 0.0
        %1039 = vmatpush.msra.mxu0 0.0
        %1040 = vmatpush.msra.mxu0 0.0
        %1041 = vmatpush.msra.mxu0 0.0
        %1042 = vmatpush.msra.mxu0 0.0
        %1043 = vmatpush.msra.mxu0 0.0
        %1044 = vmatpush.msra.mxu0 0.0
        %1045 = vmatpush.msra.mxu0 %v1029
        %1046 = vmatpush.msra.mxu0 %v1028
        %1047 = vmatpush.msra.mxu0 %v1027
        %1048 = vmatpush.msra.mxu0 %v1026
        %1049 = vmatmul.f32.gmra.mxu0 %v1031
        %v1050 = vpop.f32.mrf.mxu0
        %v1051 = vadd.f32 0.0, %v1050
        %1052 = vdwg.mxu0
        %v1053 = vmul.f32 %v1051, 0.35355338
        %1055 = vrot.lane.b32.xlu0 %v1051, 96
        %v1056 = vpop.permute.xlu0 %1055
        %v1058 = vsel %vm567, %v1053, 0
        %v1060 = vsel %vm567, %v1056, 0
        %1062 = vmatpush.xpose.msra.mxu0 0.0
        %1063 = vmatpush.xpose.msra.mxu0 0.0
        %1064 = vmatpush.xpose.msra.mxu0 0.0
        %1065 = vmatpush.xpose.msra.mxu0 0.0
        %1066 = vmatpush.xpose.msra.mxu0 0.0
        %1067 = vmatpush.xpose.msra.mxu0 0.0
        %1068 = vmatpush.xpose.msra.mxu0 0.0
        %1069 = vmatpush.xpose.msra.mxu0 0.0
        %1070 = vmatpush.xpose.msra.mxu0 0.0
        %1071 = vmatpush.xpose.msra.mxu0 0.0
        %1072 = vmatpush.xpose.msra.mxu0 0.0
        %1073 = vmatpush.xpose.msra.mxu0 0.0
        %1074 = vmatpush.xpose.msra.mxu0 0.0
        %1075 = vmatpush.xpose.msra.mxu0 0.0
        %1076 = vmatpush.xpose.msra.mxu0 0.0
        %1077 = vmatpush.xpose.msra.mxu0 %v1060
        %1078 = vmatmul.f32.gmra.mxu0 %v1058
        %v1079 = vpop.f32.mrf.mxu0
        %v1080 = vadd.f32 0.0, %v1079
        %1081 = vdwg.mxu0
        %v1082 = vsel %vm495, -inf, %v1080
        %v1083 = vsel %vm567, %v1082, -inf
        %1084 = vmax.xlane.f32.xlu0 %v1083
        %v1085 = vpop.xlane.xlu0 %1084
        %v1086 = vsub.f32 %v1082, %v1085
        %v1087 = vmul.f32 %v1086, 1.442695
        %v1088 = vpow.pop %v1087
        %v1089 = vsel %vm567, %v1088, 0.0
        %1090 = vadd.xlane.f32.xlu0 %v1089
        %v1091 = vpop.xlane.xlu0 %1090
        %v1092 = vrcp.pop %v1091
        %v1093 = vmul.f32 %v1088, %v1092
        %1094 = vrot.lane.b32.xlu0 %v1051, 64
        %v1095 = vpop.permute.xlu0 %1094
        %v1098 = vsel %vm567, %v1093, 0
        %1100 = vmatpush.msra.mxu0 0.0
        %1101 = vmatpush.msra.mxu0 0.0
        %1102 = vmatpush.msra.mxu0 0.0
        %1103 = vmatpush.msra.mxu0 0.0
        %1104 = vmatpush.msra.mxu0 0.0
        %1105 = vmatpush.msra.mxu0 0.0
        %1106 = vmatpush.msra.mxu0 0.0
        %1107 = vmatpush.msra.mxu0 0.0
        %1108 = vmatpush.msra.mxu0 0.0
        %1109 = vmatpush.msra.mxu0 0.0
        %1110 = vmatpush.msra.mxu0 0.0
        %1111 = vmatpush.msra.mxu0 0.0
        %1112 = vmatpush.msra.mxu0 0.0
        %1113 = vmatpush.msra.mxu0 0.0
        %1114 = vmatpush.msra.mxu0 0.0
        %1115 = vmatpush.msra.mxu0 %v1095
        %1116 = vmatmul.f32.gmra.mxu0 %v1098
        %v1117 = vpop.f32.mrf.mxu0
        %v1118 = vadd.f32 0.0, %v1117
        %1119 = vdwg.mxu0
        %1120 = vrot.lane.b32.xlu0 %v1053, 120
        %v1121 = vpop.permute.xlu0 %1120
        %1122 = vrot.lane.b32.xlu0 %v1051, 88
        %v1123 = vpop.permute.xlu0 %1122
        %v1124 = vsel %vm567, %v1121, 0
        %v1126 = vsel %vm567, %v1123, 0
        %1128 = vmatpush.xpose.msra.mxu0 0.0
        %1129 = vmatpush.xpose.msra.mxu0 0.0
        %1130 = vmatpush.xpose.msra.mxu0 0.0
        %1131 = vmatpush.xpose.msra.mxu0 0.0
        %1132 = vmatpush.xpose.msra.mxu0 0.0
        %1133 = vmatpush.xpose.msra.mxu0 0.0
        %1134 = vmatpush.xpose.msra.mxu0 0.0
        %1135 = vmatpush.xpose.msra.mxu0 0.0
        %1136 = vmatpush.xpose.msra.mxu0 0.0
        %1137 = vmatpush.xpose.msra.mxu0 0.0
        %1138 = vmatpush.xpose.msra.mxu0 0.0
        %1139 = vmatpush.xpose.msra.mxu0 0.0
        %1140 = vmatpush.xpose.msra.mxu0 0.0
        %1141 = vmatpush.xpose.msra.mxu0 0.0
        %1142 = vmatpush.xpose.msra.mxu0 0.0
        %1143 = vmatpush.xpose.msra.mxu0 %v1126
        %1144 = vmatmul.f32.gmra.mxu0 %v1124
        %v1145 = vpop.f32.mrf.mxu0
        %v1146 = vadd.f32 0.0, %v1145
        %1147 = vdwg.mxu0
        %v1148 = vsel %vm495, -inf, %v1146
        %v1149 = vsel %vm567, %v1148, -inf
        %1150 = vmax.xlane.f32.xlu0 %v1149
        %v1151 = vpop.xlane.xlu0 %1150
        %v1152 = vsub.f32 %v1148, %v1151
        %v1153 = vmul.f32 %v1152, 1.442695
        %v1154 = vpow.pop %v1153
        %v1155 = vsel %vm567, %v1154, 0.0
        %1156 = vadd.xlane.f32.xlu0 %v1155
        %v1157 = vpop.xlane.xlu0 %1156
        %v1158 = vrcp.pop %v1157
        %v1159 = vmul.f32 %v1154, %v1158
        %1160 = vrot.lane.b32.xlu0 %v1051, 56
        %v1161 = vpop.permute.xlu0 %1160
        %v1164 = vsel %vm567, %v1159, 0
        %1166 = vmatpush.msra.mxu0 0.0
        %1167 = vmatpush.msra.mxu0 0.0
        %1168 = vmatpush.msra.mxu0 0.0
        %1169 = vmatpush.msra.mxu0 0.0
        %1170 = vmatpush.msra.mxu0 0.0
        %1171 = vmatpush.msra.mxu0 0.0
        %1172 = vmatpush.msra.mxu0 0.0
        %1173 = vmatpush.msra.mxu0 0.0
        %1174 = vmatpush.msra.mxu0 0.0
        %1175 = vmatpush.msra.mxu0 0.0
        %1176 = vmatpush.msra.mxu0 0.0
        %1177 = vmatpush.msra.mxu0 0.0
        %1178 = vmatpush.msra.mxu0 0.0
        %1179 = vmatpush.msra.mxu0 0.0
        %1180 = vmatpush.msra.mxu0 0.0
        %1181 = vmatpush.msra.mxu0 %v1161
        %1182 = vmatmul.f32.gmra.mxu0 %v1164
        %v1183 = vpop.f32.mrf.mxu0
        %v1184 = vadd.f32 0.0, %v1183
        %1185 = vdwg.mxu0
        %1186 = vrot.lane.b32.xlu0 %v1053, 112
        %v1187 = vpop.permute.xlu0 %1186
        %1188 = vrot.lane.b32.xlu0 %v1051, 80
        %v1189 = vpop.permute.xlu0 %1188
        %v1190 = vsel %vm567, %v1187, 0
        %v1192 = vsel %vm567, %v1189, 0
        %1194 = vmatpush.xpose.msra.mxu0 0.0
        %1195 = vmatpush.xpose.msra.mxu0 0.0
        %1196 = vmatpush.xpose.msra.mxu0 0.0
        %1197 = vmatpush.xpose.msra.mxu0 0.0
        %1198 = vmatpush.xpose.msra.mxu0 0.0
        %1199 = vmatpush.xpose.msra.mxu0 0.0
        %1200 = vmatpush.xpose.msra.mxu0 0.0
        %1201 = vmatpush.xpose.msra.mxu0 0.0
        %1202 = vmatpush.xpose.msra.mxu0 0.0
        %1203 = vmatpush.xpose.msra.mxu0 0.0
        %1204 = vmatpush.xpose.msra.mxu0 0.0
        %1205 = vmatpush.xpose.msra.mxu0 0.0
        %1206 = vmatpush.xpose.msra.mxu0 0.0
        %1207 = vmatpush.xpose.msra.mxu0 0.0
        %1208 = vmatpush.xpose.msra.mxu0 0.0
        %1209 = vmatpush.xpose.msra.mxu0 %v1192
        %1210 = vmatmul.f32.gmra.mxu0 %v1190
        %v1211 = vpop.f32.mrf.mxu0
        %v1212 = vadd.f32 0.0, %v1211
        %1213 = vdwg.mxu0
        %v1214 = vsel %vm495, -inf, %v1212
        %v1215 = vsel %vm567, %v1214, -inf
        %1216 = vmax.xlane.f32.xlu0 %v1215
        %v1217 = vpop.xlane.xlu0 %1216
        %v1218 = vsub.f32 %v1214, %v1217
        %v1219 = vmul.f32 %v1218, 1.442695
        %v1220 = vpow.pop %v1219
        %v1221 = vsel %vm567, %v1220, 0.0
        %1222 = vadd.xlane.f32.xlu0 %v1221
        %v1223 = vpop.xlane.xlu0 %1222
        %v1224 = vrcp.pop %v1223
        %v1225 = vmul.f32 %v1220, %v1224
        %1226 = vrot.lane.b32.xlu0 %v1051, 48
        %v1227 = vpop.permute.xlu0 %1226
        %v1230 = vsel %vm567, %v1225, 0
        %1232 = vmatpush.msra.mxu0 0.0
        %1233 = vmatpush.msra.mxu0 0.0
        %1234 = vmatpush.msra.mxu0 0.0
        %1235 = vmatpush.msra.mxu0 0.0
        %1236 = vmatpush.msra.mxu0 0.0
        %1237 = vmatpush.msra.mxu0 0.0
        %1238 = vmatpush.msra.mxu0 0.0
        %1239 = vmatpush.msra.mxu0 0.0
        %1240 = vmatpush.msra.mxu0 0.0
        %1241 = vmatpush.msra.mxu0 0.0
        %1242 = vmatpush.msra.mxu0 0.0
        %1243 = vmatpush.msra.mxu0 0.0
        %1244 = vmatpush.msra.mxu0 0.0
        %1245 = vmatpush.msra.mxu0 0.0
        %1246 = vmatpush.msra.mxu0 0.0
        %1247 = vmatpush.msra.mxu0 %v1227
        %1248 = vmatmul.f32.gmra.mxu0 %v1230
        %v1249 = vpop.f32.mrf.mxu0
        %v1250 = vadd.f32 0.0, %v1249
        %1251 = vdwg.mxu0
        %1252 = vrot.lane.b32.xlu0 %v1053, 104
        %v1253 = vpop.permute.xlu0 %1252
        %1254 = vrot.lane.b32.xlu0 %v1051, 72
        %v1255 = vpop.permute.xlu0 %1254
        %v1256 = vsel %vm567, %v1253, 0
        %v1258 = vsel %vm567, %v1255, 0
        %1260 = vmatpush.xpose.msra.mxu0 0.0
        %1261 = vmatpush.xpose.msra.mxu0 0.0
        %1262 = vmatpush.xpose.msra.mxu0 0.0
        %1263 = vmatpush.xpose.msra.mxu0 0.0
        %1264 = vmatpush.xpose.msra.mxu0 0.0
        %1265 = vmatpush.xpose.msra.mxu0 0.0
        %1266 = vmatpush.xpose.msra.mxu0 0.0
        %1267 = vmatpush.xpose.msra.mxu0 0.0
        %1268 = vmatpush.xpose.msra.mxu0 0.0
        %1269 = vmatpush.xpose.msra.mxu0 0.0
        %1270 = vmatpush.xpose.msra.mxu0 0.0
        %1271 = vmatpush.xpose.msra.mxu0 0.0
        %1272 = vmatpush.xpose.msra.mxu0 0.0
        %1273 = vmatpush.xpose.msra.mxu0 0.0
        %1274 = vmatpush.xpose.msra.mxu0 0.0
        %1275 = vmatpush.xpose.msra.mxu0 %v1258
        %1276 = vmatmul.f32.gmra.mxu0 %v1256
        %v1277 = vpop.f32.mrf.mxu0
        %v1278 = vadd.f32 0.0, %v1277
        %1279 = vdwg.mxu0
        %v1280 = vsel %vm495, -inf, %v1278
        %v1281 = vsel %vm567, %v1280, -inf
        %1282 = vmax.xlane.f32.xlu0 %v1281
        %v1283 = vpop.xlane.xlu0 %1282
        %v1284 = vsub.f32 %v1280, %v1283
        %v1285 = vmul.f32 %v1284, 1.442695
        %v1286 = vpow.pop %v1285
        %v1287 = vsel %vm567, %v1286, 0.0
        %1288 = vadd.xlane.f32.xlu0 %v1287
        %v1289 = vpop.xlane.xlu0 %1288
        %v1290 = vrcp.pop %v1289
        %v1291 = vmul.f32 %v1286, %v1290
        %1292 = vrot.lane.b32.xlu0 %v1051, 40
        %v1293 = vpop.permute.xlu0 %1292
        %v1296 = vsel %vm567, %v1291, 0
        %1298 = vmatpush.msra.mxu0 0.0
        %1299 = vmatpush.msra.mxu0 0.0
        %1300 = vmatpush.msra.mxu0 0.0
        %1301 = vmatpush.msra.mxu0 0.0
        %1302 = vmatpush.msra.mxu0 0.0
        %1303 = vmatpush.msra.mxu0 0.0
        %1304 = vmatpush.msra.mxu0 0.0
        %1305 = vmatpush.msra.mxu0 0.0
        %1306 = vmatpush.msra.mxu0 0.0
        %1307 = vmatpush.msra.mxu0 0.0
        %1308 = vmatpush.msra.mxu0 0.0
        %1309 = vmatpush.msra.mxu0 0.0
        %1310 = vmatpush.msra.mxu0 0.0
        %1311 = vmatpush.msra.mxu0 0.0
        %1312 = vmatpush.msra.mxu0 0.0
        %1313 = vmatpush.msra.mxu0 %v1293
        %1314 = vmatmul.f32.gmra.mxu0 %v1296
        %v1315 = vpop.f32.mrf.mxu0
        %v1316 = vadd.f32 0.0, %v1315
        %1317 = vdwg.mxu0
        %1319 = vrot.lane.b32.xlu0 %v1184, 8
        %v1320 = vpop.permute.xlu0 %1319
        %1323 = vrot.lane.b32.xlu0 %v1250, 16
        %v1324 = vpop.permute.xlu0 %1323
        %1327 = vrot.lane.b32.xlu0 %v1316, 24
        %v1328 = vpop.permute.xlu0 %1327
        %v1330 = vsel %vm567, %v1118, %v1320
        %v1331 = vsel %vm842, %v1330, %v1324
        %v1332 = vsel %vm844, %v1331, %v1328
        %s1333 = scalar_lea.vmem %s4, 32
        %v1334 = vld [vmem:[%s1333] sm:$0xff]
        %v1335 = vld [vmem:[%s1333 + $0x8] sm:$0xff]
        %v1336 = vld [vmem:[%s1333 + $0x10] sm:$0xff]
        %v1337 = vld [vmem:[%s1333 + $0x18] sm:$0xff]
        %s1338 = scalar_lea.vmem %s5, 1
        %v1339 = vld [vmem:[%s1338] sm:$0x1]
        %v1341 = vperm.slane %v1339, 0
        %v1344 = vsel %vm498, %v1332, 0
        %1346 = vmatpush.msra.mxu0 0.0
        %1347 = vmatpush.msra.mxu0 0.0
        %1348 = vmatpush.msra.mxu0 0.0
        %1349 = vmatpush.msra.mxu0 0.0
        %1350 = vmatpush.msra.mxu0 0.0
        %1351 = vmatpush.msra.mxu0 0.0
        %1352 = vmatpush.msra.mxu0 0.0
        %1353 = vmatpush.msra.mxu0 0.0
        %1354 = vmatpush.msra.mxu0 0.0
        %1355 = vmatpush.msra.mxu0 0.0
        %1356 = vmatpush.msra.mxu0 0.0
        %1357 = vmatpush.msra.mxu0 0.0
        %1358 = vmatpush.msra.mxu0 %v1337
        %1359 = vmatpush.msra.mxu0 %v1336
        %1360 = vmatpush.msra.mxu0 %v1335
        %1361 = vmatpush.msra.mxu0 %v1334
        %1362 = vmatmul.f32.gmra.mxu0 %v1344
        %v1363 = vpop.f32.mrf.mxu0
        %v1364 = vadd.f32 %v1341, %v1363
        %1365 = vdwg.mxu0
        %v1366 = vadd.f32 %v1364, %v990
        %s1367 = scalar_lea.vmem %s6, 1
        %v1368 = vld [vmem:[%s1367] sm:$0x1]
        %s1369 = scalar_lea.vmem %s7, 1
        %v1370 = vld [vmem:[%s1369] sm:$0x1]
        %v1371 = vsel %vm498, %v1366, 0.0
        %1372 = vadd.xlane.f32.xlu0 %v1371
        %v1373 = vpop.xlane.xlu0 %1372
        %v1374 = vmul.f32 %v1373, %v508
        %v1375 = vsub.f32 %v1366, %v1374
        %v1376 = vmul.f32 %v1375, %v1375
        %v1377 = vsel %vm498, %v1376, 0.0
        %1378 = vadd.xlane.f32.xlu0 %v1377
        %v1379 = vpop.xlane.xlu0 %1378
        %v1380 = vmul.f32 %v1379, %v508
        %v1381 = vadd.f32 %v1380, 1e-05
        %v1382 = vrsqrt.pop %v1381
        %v1383 = vmul.f32 %v1382, %v1381
        %v1384 = vmul.f32 %v1383, %v1382
        %v1385 = vmul.f32 0.5, %v1384
        %v1386 = vsub.f32 1.5, %v1385
        %v1387 = vmul.f32 %v1382, %v1386
        %vm1388 = vweird.f32 %v1381
        %vm1389 = vweird.f32 %v1382
        %vm1390 = vmor %vm1388, %vm1389
        %v1391 = vsel %vm1390, %v1382, %v1387
        %v1392 = vmul.f32 %v1375, %v1391
        %v1394 = vperm.slane %v1368, 0
        %v1396 = vmul.f32 %v1394, %v1392
        %v1398 = vperm.slane %v1370, 0
        %v1400 = vadd.f32 %v1396, %v1398
        %s1401 = scalar_lea.vmem %s8, 32
        %v1402 = vld [vmem:[%s1401] sm:$0xff]
        %v1403 = vld [vmem:[%s1401 + $0x8] sm:$0xff]
        %v1404 = vld [vmem:[%s1401 + $0x10] sm:$0xff]
        %v1405 = vld [vmem:[%s1401 + $0x18] sm:$0xff]
        %s1406 = scalar_lea.vmem %s9, 1
        %v1407 = vld [vmem:[%s1406] sm:$0x1]
        %v1409 = vperm.slane %v1407, 0
        %v1412 = vsel %vm498, %v1400, 0
        %1414 = vmatpush.msra.mxu0 0.0
        %1415 = vmatpush.msra.mxu0 0.0
        %1416 = vmatpush.msra.mxu0 0.0
        %1417 = vmatpush.msra.mxu0 0.0
        %1418 = vmatpush.msra.mxu0 0.0
        %1419 = vmatpush.msra.mxu0 0.0
        %1420 = vmatpush.msra.mxu0 0.0
        %1421 = vmatpush.msra.mxu0 0.0
        %1422 = vmatpush.msra.mxu0 0.0
        %1423 = vmatpush.msra.mxu0 0.0
        %1424 = vmatpush.msra.mxu0 0.0
        %1425 = vmatpush.msra.mxu0 0.0
        %1426 = vmatpush.msra.mxu0 %v1405
        %1427 = vmatpush.msra.mxu0 %v1404
        %1428 = vmatpush.msra.mxu0 %v1403
        %1429 = vmatpush.msra.mxu0 %v1402
        %1430 = vmatmul.f32.gmra.mxu0 %v1412
        %v1431 = vpop.f32.mrf.mxu0
        %v1432 = vadd.f32 %v1409, %v1431
        %1433 = vdwg.mxu0
        %v1434 = vmul.f32 %v1432, 0.5
        %v1435 = vmul.f32 %v1432, %v1432
        %v1436 = vmul.f32 %v1432, %v1435
        %v1437 = vmul.f32 %v1436, 0.044715
        %v1438 = vadd.f32 %v1432, %v1437
        %v1439 = vmul.f32 %v1438, 0.7978845
        %v1440 = vtanh.pop %v1439
        %v1441 = vadd.f32 %v1440, 1.0
        %v1442 = vmul.f32 %v1434, %v1441
        %s1443 = scalar_lea.vmem %s10, 128
        %v1444 = vld [vmem:[%s1443] sm:$0xff]
        %v1445 = vld [vmem:[%s1443 + $0x8] sm:$0xff]
        %v1446 = vld [vmem:[%s1443 + $0x10] sm:$0xff]
        %v1447 = vld [vmem:[%s1443 + $0x18] sm:$0xff]
        %v1448 = vld [vmem:[%s1443 + $0x20] sm:$0xff]
        %v1449 = vld [vmem:[%s1443 + $0x28] sm:$0xff]
        %v1450 = vld [vmem:[%s1443 + $0x30] sm:$0xff]
        %v1451 = vld [vmem:[%s1443 + $0x38] sm:$0xff]
        %v1452 = vld [vmem:[%s1443 + $0x40] sm:$0xff]
        %v1453 = vld [vmem:[%s1443 + $0x48] sm:$0xff]
        %v1454 = vld [vmem:[%s1443 + $0x50] sm:$0xff]
        %v1455 = vld [vmem:[%s1443 + $0x58] sm:$0xff]
        %v1456 = vld [vmem:[%s1443 + $0x60] sm:$0xff]
        %v1457 = vld [vmem:[%s1443 + $0x68] sm:$0xff]
        %v1458 = vld [vmem:[%s1443 + $0x70] sm:$0xff]
        %v1459 = vld [vmem:[%s1443 + $0x78] sm:$0xff]
        %s1460 = scalar_lea.vmem %s11, 1
        %v1461 = vld [vmem:[%s1460] sm:$0x1]
        %v1463 = vperm.slane %v1461, 0
        %1465 = vmatpush.msra.mxu0 %v1459
        %1466 = vmatpush.msra.mxu0 %v1458
        %1467 = vmatpush.msra.mxu0 %v1457
        %1468 = vmatpush.msra.mxu0 %v1456
        %1469 = vmatpush.msra.mxu0 %v1455
        %1470 = vmatpush.msra.mxu0 %v1454
        %1471 = vmatpush.msra.mxu0 %v1453
        %1472 = vmatpush.msra.mxu0 %v1452
        %1473 = vmatpush.msra.mxu0 %v1451
        %1474 = vmatpush.msra.mxu0 %v1450
        %1475 = vmatpush.msra.mxu0 %v1449
        %1476 = vmatpush.msra.mxu0 %v1448
        %1477 = vmatpush.msra.mxu0 %v1447
        %1478 = vmatpush.msra.mxu0 %v1446
        %1479 = vmatpush.msra.mxu0 %v1445
        %1480 = vmatpush.msra.mxu0 %v1444
        %1481 = vmatmul.f32.gmra.mxu0 %v1442
        %v1482 = vpop.f32.mrf.mxu0
        %v1483 = vadd.f32 %v1463, %v1482
        %1484 = vdwg.mxu0
        %v1485 = vadd.f32 %v1483, %v1366
        %v1486 = vld [vmem:[%s12] sm:$0x1]
        %v1487 = vld [vmem:[%s13] sm:$0x1]
        %v1488 = vsel %vm498, %v1485, 0.0
        %1489 = vadd.xlane.f32.xlu0 %v1488
        %v1490 = vpop.xlane.xlu0 %1489
        %v1491 = vmul.f32 %v1490, %v508
        %v1492 = vsub.f32 %v1485, %v1491
        %v1493 = vmul.f32 %v1492, %v1492
        %v1494 = vsel %vm498, %v1493, 0.0
        %1495 = vadd.xlane.f32.xlu0 %v1494
        %v1496 = vpop.xlane.xlu0 %1495
        %v1497 = vmul.f32 %v1496, %v508
        %v1498 = vadd.f32 %v1497, 1e-05
        %v1499 = vrsqrt.pop %v1498
        %v1500 = vmul.f32 %v1499, %v1498
        %v1501 = vmul.f32 %v1500, %v1499
        %v1502 = vmul.f32 0.5, %v1501
        %v1503 = vsub.f32 1.5, %v1502
        %v1504 = vmul.f32 %v1499, %v1503
        %vm1505 = vweird.f32 %v1498
        %vm1506 = vweird.f32 %v1499
        %vm1507 = vmor %vm1505, %vm1506
        %v1508 = vsel %vm1507, %v1499, %v1504
        %v1509 = vmul.f32 %v1492, %v1508
        %v1511 = vperm.slane %v1486, 0
        %v1513 = vmul.f32 %v1511, %v1509
        %v1515 = vperm.slane %v1487, 0
        %v1517 = vadd.f32 %v1513, %v1515
        %v1518 = vld [vmem:[%s14] sm:$0xff]
        %v1519 = vld [vmem:[%s14 + $0x8] sm:$0xff]
        %v1520 = vld [vmem:[%s14 + $0x10] sm:$0xff]
        %v1521 = vld [vmem:[%s14 + $0x18] sm:$0xff]
        %v1522 = vld [vmem:[%s14 + $0x20] sm:$0xff]
        %v1523 = vld [vmem:[%s14 + $0x28] sm:$0xff]
        %v1524 = vld [vmem:[%s14 + $0x30] sm:$0xff]
        %v1525 = vld [vmem:[%s14 + $0x38] sm:$0xff]
        %v1527 = vsel %vm498, %v1517, 0
        %1529 = vmatpush.msra.mxu0 0.0
        %1530 = vmatpush.msra.mxu0 0.0
        %1531 = vmatpush.msra.mxu0 0.0
        %1532 = vmatpush.msra.mxu0 0.0
        %1533 = vmatpush.msra.mxu0 0.0
        %1534 = vmatpush.msra.mxu0 0.0
        %1535 = vmatpush.msra.mxu0 0.0
        %1536 = vmatpush.msra.mxu0 0.0
        %1537 = vmatpush.msra.mxu0 0.0
        %1538 = vmatpush.msra.mxu0 0.0
        %1539 = vmatpush.msra.mxu0 0.0
        %1540 = vmatpush.msra.mxu0 0.0
        %1541 = vmatpush.msra.mxu0 %v1524
        %1542 = vmatpush.msra.mxu0 %v1522
        %1543 = vmatpush.msra.mxu0 %v1520
        %1544 = vmatpush.msra.mxu0 %v1518
        %1545 = vmatmul.f32.gmra.mxu0 %v1527
        %v1546 = vpop.f32.mrf.mxu0
        %v1547 = vadd.f32 0.0, %v1546
        %1548 = vdwg.mxu0
        %1549 = vmatpush.msra.mxu0 0.0
        %1550 = vmatpush.msra.mxu0 0.0
        %1551 = vmatpush.msra.mxu0 0.0
        %1552 = vmatpush.msra.mxu0 0.0
        %1553 = vmatpush.msra.mxu0 0.0
        %1554 = vmatpush.msra.mxu0 0.0
        %1555 = vmatpush.msra.mxu0 0.0
        %1556 = vmatpush.msra.mxu0 0.0
        %1557 = vmatpush.msra.mxu0 0.0
        %1558 = vmatpush.msra.mxu0 0.0
        %1559 = vmatpush.msra.mxu0 0.0
        %1560 = vmatpush.msra.mxu0 0.0
        %1561 = vmatpush.msra.mxu0 %v1525
        %1562 = vmatpush.msra.mxu0 %v1523
        %1563 = vmatpush.msra.mxu0 %v1521
        %1564 = vmatpush.msra.mxu0 %v1519
        %1565 = vmatmul.f32.gmra.mxu0 %v1527
        %v1566 = vpop.f32.mrf.mxu0
        %v1567 = vadd.f32 0.0, %v1566
        %1568 = vdwg.mxu0
        %1569 = vst [vmem:[%s485] sm:$0xff] %v1547
        %1570 = vst [vmem:[%s485 + $0x8] sm:$0xff] %v1567
        %s1571 = sand.u32 %s357, 1
        %s1572 = scalar_lea.sflag [#allocation3], %s1571
        %s1573 = sand.u32 %s357, 1
        %s1574 = smul.addr %s1573, 16
        %s1575 = scalar_lea.vmem [#allocation2], %s1574
        // Predicated region
        $region81: #{tpu_custom_call.1} parent=79 // pred_check
          %p1576 = pneg %p367
        $region82: #{tpu_custom_call.1} parent=79 // pred_check_branch
          %1578 = sbr.rel (%p1576) target = $region84
        $region83: #{tpu_custom_call.1} parent=79 // pred_region
          %1580 = vsyncadd %s1572, 0
          %s1581 = smul.addr %s29, 2
          %s1582 = smul.addr %s1581, 8
          %s1583 = scalar_lea.hbm %s15, %s1582
          %s1585 = sshll.u32 %s1575, 4
          %s1586 = int_to_ptr.vmem [resolvable:$true] %s1585
          %s1587 = sshll.u32 %s1583, 4
          %s1588 = int_to_ptr.hbm [resolvable:$true] %s1587
          %1590 = dma.vmem_to_hbm [thread:$0]  %s1586, 256, %s1588, %s1572
        $region84: #{tpu_custom_call.1} parent=79 // pred_fallthru
          _
      $region80: #{tpu_custom_call.1} parent=5 // pred_fallthru
        _
      %p1591 = scmp.le.s32.totalorder 2, %s24
      // Predicated region
      $region85: #{tpu_custom_call.1} parent=5 // pred_check
        %p1592 = pneg %p1591
      $region86: #{tpu_custom_call.1} parent=5 // pred_check_branch
        %1594 = sbr.rel (%p1592) target = $region88
      $region87: #{tpu_custom_call.1} parent=5 // pred_region
        %s1595 = ssub.s32 %s24, 2
        // Predicated region
        $region89: #{tpu_custom_call.1} parent=87 // pred_check
          %p1596 = pneg %p373
        $region90: #{tpu_custom_call.1} parent=87 // pred_check_branch
          %1598 = sbr.rel (%p1596) target = $region92
        $region91: #{tpu_custom_call.1} parent=87 // pred_region
          %s1599 = sand.u32 %s358, 1
          %s1600 = scalar_lea.sflag [#allocation3], %s1599
          %s1601 = sand.u32 %s358, 1
          %s1602 = smul.addr %s1601, 16
          %s1603 = scalar_lea.vmem [#allocation2], %s1602
          %1605 = dma.done %s1600, 256
        $region92: #{tpu_custom_call.1} parent=87 // pred_fallthru
          _
      $region88: #{tpu_custom_call.1} parent=5 // pred_fallthru
        _
    $region6: #{tpu_custom_call.1} parent=1 // loop_footer
      %s28 = sadd.s32 1, %s24
    $region7: #{tpu_custom_call.1} parent=1 // loop_footer_branch
      %23 = sbr.rel target = $region3
    $region8: #{tpu_custom_call.1} parent=1 // loop_exit
      _
    %1606 = vsyncpa [#allocation3], 1
    %s1607 = scalar_lea.sflag [#allocation3], 1
    %1608 = vsyncpa %s1607, 1

</llo_original>
